<compile_context>
chip_gen: v6e
topology: v6e:2x2x1
jax: 0.10.0
libtpu: 0.0.40
codegen_flags: <defaults>
</compile_context>

<pallas_src>
import functools

import jax
import jax.numpy as jnp
from jax.experimental import pallas as pl
from jax.experimental.pallas import tpu as pltpu


def _round_up(x, m):
    return (x + m - 1) // m * m


def _vmem_limit(block_bytes):
    # double-buffered blocks + margin for weights / internal scratch, clamped.
    return int(min(32 * 1024 * 1024, 2 * block_bytes + 2 * 1024 * 1024))


# ----------------------------- Pallas kernels ------------------------------

def _conv_pool_kernel(p_ref, w_ref, b_ref, o_ref, *, tile_n, pp):
    """One corner-stacked matmul + pool-max + bias + ReLU for a tile of images.

    p_ref : (tile_n*4*pp, K)   im2col patches, rows ordered (image, corner, position)
    w_ref : (K, Cout)          conv weights in (dh, dw, ci) row order
    b_ref : (1, Cout)
    o_ref : (tile_n, pp, Cout) pooled + ReLU'd activations (positions row-major, padded)
    """
    cout = w_ref.shape[1]
    # Single big MXU matmul for all images x 4 pool corners x positions.
    z = jnp.dot(p_ref[...], w_ref[...], preferred_element_type=jnp.float32)
    z = z.reshape(tile_n, 4, pp, cout)          # pp % 8 == 0 -> aligned sublane split
    # 2x2 max-pool == elementwise max over the 4 corner slabs (VPU only).
    zmax = jnp.maximum(jnp.maximum(z[:, 0], z[:, 1]),
                       jnp.maximum(z[:, 2], z[:, 3]))
    # relu(max(conv) + b) == pool(relu(conv + b)) since bias is corner-independent.
    o_ref[...] = jnp.maximum(zmax + b_ref[...], 0.0).astype(o_ref.dtype)


def _fc_fused_kernel(x_ref, w1_ref, b1_ref, w2_ref, b2_ref, w3_ref, b3_ref, o_ref):
    """relu(x@w1+b1) -> relu(@w2+b2) -> @w3+b3, fused (intermediates never hit HBM)."""
    h = jnp.dot(x_ref[...], w1_ref[...], preferred_element_type=jnp.float32) + b1_ref[...]
    h = jnp.maximum(h, 0.0)
    h = jnp.dot(h, w2_ref[...], preferred_element_type=jnp.float32) + b2_ref[...]
    h = jnp.maximum(h, 0.0)
    h = jnp.dot(h, w3_ref[...], preferred_element_type=jnp.float32) + b3_ref[...]
    o_ref[...] = h.astype(o_ref.dtype)


# ------------------------------- wrappers -----------------------------------

def conv_relu_pool(x_nhwc, w2d, b_row, *, kh=5, kw=5, max_tile_n=8):
    """VALID conv (stride 1) + bias + ReLU + 2x2/2 max-pool via one Pallas kernel.

    x_nhwc: (N, H, W, Cin) f32; w2d: (KH*KW*Cin, Cout); b_row: (1, Cout).
    Returns pooled NHWC output (N, (H-KH+1)//2, (W-KW+1)//2, Cout).
    """
    n, h, w, cin = x_nhwc.shape
    kk, cout = w2d.shape
    assert kk == kh * kw * cin
    oh, ow = h - kh + 1, w - kw + 1
    assert oh >= 2 and ow >= 2
    ohp, owp = oh // 2, ow // 2
    p = ohp * owp
    pp = _round_up(p, 8)                       # pad positions -> aligned reshapes

    # --- XLA-side layout glue (tiny): im2col + pool-corner regrouping -----------
    cols = [x_nhwc[:, dh:dh + oh, dw:dw + ow, :] for dh in range(kh) for dw in range(kw)]
    pat = jnp.concatenate(cols, axis=-1)                        # (N, OH, OW, K)
    pat = pat[:, :2 * ohp, :2 * owp, :]
    pat = pat.reshape(n, ohp, 2, owp, 2, kk)
    pat = pat.transpose(0, 2, 4, 1, 3, 5).reshape(n, 4, p, kk)  # corner = ph*2 + pw

    # Batch tile: keep >=2 grid steps when batch >= 2 (v7x: 2 TCs), cap for VMEM.
    tile_n = 1 if n <= 2 else min(max_tile_n, max(1, n // 2))
    n_pad = _round_up(n, tile_n)
    pat = jnp.pad(pat, ((0, n_pad - n), (0, 0), (0, pp - p), (0, 0)))
    pat = pat.reshape(n_pad * 4 * pp, kk)       # rows ordered (image, corner, position)

    block_bytes = (tile_n * 4 * pp * kk + tile_n * pp * cout) * 4
    out = pl.pallas_call(
        functools.partial(_conv_pool_kernel, tile_n=tile_n, pp=pp),
        out_shape=jax.ShapeDtypeStruct((n_pad, pp, cout), jnp.float32),
        grid=(n_pad // tile_n,),
        in_specs=[pl.BlockSpec((tile_n * 4 * pp, kk), lambda i: (i, 0)),
                  pl.BlockSpec((kk, cout), lambda i: (0, 0)),
                  pl.BlockSpec((1, cout), lambda i: (0, 0))],
        out_specs=pl.BlockSpec((tile_n, pp, cout), lambda i: (i, 0, 0)),
        compiler_params=pltpu.CompilerParams(
            dimension_semantics=("parallel",),
            vmem_limit_bytes=_vmem_limit(block_bytes)),
    )(pat, w2d, b_row)

    return out[:n, :p, :].reshape(n, ohp, owp, cout)


def fc_stack(x, w1, b1, w2, b2, w3, b3):
    """Fused fc1(relu)->fc2(relu)->fc3. x: (N, 400); weights pre-transposed (K, N_out).

    w3/b3 are pre-padded to 128 output columns (lane-dense store); caller slices.
    """
    n, kin = x.shape
    nout = w3.shape[1]
    tile_m = min(1024, max(8, _round_up(max(n // 2, 1), 8)))
    m_pad = _round_up(n, tile_m)
    x = jnp.pad(x, ((0, m_pad - n), (0, 0)))

    def full(shape):
        return pl.BlockSpec(shape, lambda i: (0,) * len(shape))

    block_bytes = (tile_m * (kin + nout) + w1.size + w2.size + w3.size) * 4
    out = pl.pallas_call(
        _fc_fused_kernel,
        out_shape=jax.ShapeDtypeStruct((m_pad, nout), jnp.float32),
        grid=(m_pad // tile_m,),
        in_specs=[pl.BlockSpec((tile_m, kin), lambda i: (i, 0)),
                  full(w1.shape), full(b1.shape),
                  full(w2.shape), full(b2.shape),
                  full(w3.shape), full(b3.shape)],
        out_specs=pl.BlockSpec((tile_m, nout), lambda i: (i, 0)),
        compiler_params=pltpu.CompilerParams(
            dimension_semantics=("parallel",),
            vmem_limit_bytes=_vmem_limit(block_bytes)),
    )(x, w1, b1, w2, b2, w3, b3)
    return out[:n]


# ------------------------------ parameters -----------------------------------

def init_params(key):
    """PyTorch-layout parameters (same init scheme as nn.Conv2d / nn.Linear defaults)."""
    ks = jax.random.split(key, 10)

    def u(k, shape, fan_in):
        bound = 1.0 / jnp.sqrt(fan_in)
        return jax.random.uniform(k, shape, jnp.float32, -bound, bound)

    return {
        "conv1_w": u(ks[0], (6, 3, 5, 5), 3 * 5 * 5),
        "conv1_b": u(ks[1], (6,), 3 * 5 * 5),
        "conv2_w": u(ks[2], (16, 6, 5, 5), 6 * 5 * 5),
        "conv2_b": u(ks[3], (16,), 6 * 5 * 5),
        "fc1_w": u(ks[4], (120, 400), 400),
        "fc1_b": u(ks[5], (120,), 400),
        "fc2_w": u(ks[6], (84, 120), 120),
        "fc2_b": u(ks[7], (84,), 120),
        "fc3_w": u(ks[8], (10, 84), 84),
        "fc3_b": u(ks[9], (10,), 84),
    }


def prepare_params(p):
    """One-time (outside jit) weight re-layout so the forward has no runtime transposes.

    * conv weights (O,I,KH,KW) -> (KH*KW*I, O), matching the im2col column order.
    * fc1 columns permuted from PyTorch's NCHW flatten (c*25+h*5+w) to the NHWC
      flatten (h*80+w*16+c) used by our pooled activations.
    * Linear weights stored (in, out); biases (1, out); fc3 zero-padded to 128 cols.
    """
    f1 = p["fc1_w"].reshape(120, 16, 5, 5).transpose(2, 3, 1, 0).reshape(400, 120)
    f3 = jnp.pad(p["fc3_w"].T, ((0, 0), (0, 128 - 10)))
    f3b = jnp.pad(p["fc3_b"].reshape(1, -1), ((0, 0), (0, 128 - 10)))
    return {
        "c1_w": jnp.transpose(p["conv1_w"], (2, 3, 1, 0)).reshape(75, 6),
        "c1_b": p["conv1_b"].reshape(1, 6),
        "c2_w": jnp.transpose(p["conv2_w"], (2, 3, 1, 0)).reshape(150, 16),
        "c2_b": p["conv2_b"].reshape(1, 16),
        "f1_w": f1,            "f1_b": p["fc1_b"].reshape(1, -1),
        "f2_w": p["fc2_w"].T,  "f2_b": p["fc2_b"].reshape(1, -1),
        "f3_w": f3,            "f3_b": f3b,
    }


# -------------------------------- forward ------------------------------------

@jax.jit
def net_forward(prm, x_nchw):
    x = jnp.transpose(x_nchw, (0, 2, 3, 1)).astype(jnp.float32)     # NHWC (N,32,32,3)
    x = conv_relu_pool(x, prm["c1_w"], prm["c1_b"])                  # (N,14,14,6)
    x = conv_relu_pool(x, prm["c2_w"], prm["c2_b"])                  # (N,5,5,16)
    x = x.reshape(x.shape[0], 5 * 5 * 16)                            # NHWC flatten (N,400)
    logits = fc_stack(x, prm["f1_w"], prm["f1_b"], prm["f2_w"], prm["f2_b"],
                      prm["f3_w"], prm["f3_b"])                      # (N,128) padded
    return logits[:, :10]


@jax.jit
def reference_forward(p, x_nchw):
    """Pure-XLA reference with exact PyTorch semantics (NCHW flatten, relu-then-pool)."""
    hi = jax.lax.Precision.HIGHEST
    x = x_nchw.astype(jnp.float32)

    def conv(x, w, b):
        y = jax.lax.conv_general_dilated(
            x, w, (1, 1), "VALID",
            dimension_numbers=("NCHW", "OIHW", "NCHW"), precision=hi)
        return jax.nn.relu(y + b.reshape(1, -1, 1, 1))

    def pool(x):
        return jax.lax.reduce_window(x, -jnp.inf, jax.lax.max,
                                     (1, 1, 2, 2), (1, 1, 2, 2), "VALID")

    x = pool(conv(x, p["conv1_w"], p["conv1_b"]))
    x = pool(conv(x, p["conv2_w"], p["conv2_b"]))
    x = x.reshape(x.shape[0], -1)
    x = jax.nn.relu(jnp.dot(x, p["fc1_w"].T, precision=hi) + p["fc1_b"])
    x = jax.nn.relu(jnp.dot(x, p["fc2_w"].T, precision=hi) + p["fc2_b"])
    return jnp.dot(x, p["fc3_w"].T, precision=hi) + p["fc3_b"]


if __name__ == "__main__":
    key = jax.random.PRNGKey(0)
    k_params, k_x = jax.random.split(key)
    params = init_params(k_params)
    prepped = prepare_params(params)

    # Forward implies 3x32x32 inputs (CIFAR-like) so the flatten is 16*5*5.
    x = jax.random.normal(k_x, (2, 3, 32, 32), dtype=jnp.float32)

    out = jax.block_until_ready(net_forward(prepped, x))
    assert out.shape == (2, 10), out.shape
    assert bool(jnp.all(jnp.isfinite(out)))

    ref = jax.block_until_ready(reference_forward(params, x))
    assert bool(jnp.allclose(out, ref, rtol=2e-2, atol=2e-2)), (
        "mismatch vs XLA reference: max abs diff "
        f"{float(jnp.max(jnp.abs(out - ref)))}")

    print("KERNEL_OK")
</pallas_src>

<mosaic_0001>
module attributes {stable_mosaic.version = 11 : i64} {
  func.func @_conv_pool_kernel(%arg0: i32, %arg1: memref<800x75xf32, #tpu.memory_space<vmem>>, %arg2: memref<75x6xf32, #tpu.memory_space<vmem>>, %arg3: memref<1x6xf32, #tpu.memory_space<vmem>>, %arg4: memref<1x200x6xf32, #tpu.memory_space<vmem>>) attributes {dimension_semantics = [#tpu.dimension_semantics<parallel>], iteration_bounds = array<i64: 2>, scalar_prefetch = 0 : i64, scratch_operands = 0 : i64, tpu.core_type = #tpu.core_type<tc>, window_params = [{transform_indices = @transform_0, window_bounds = array<i64: 800, 75>}, {pipeline_mode = #tpu.pipeline_mode<synchronous>, transform_indices = @transform_1, window_bounds = array<i64: 75, 6>}, {pipeline_mode = #tpu.pipeline_mode<synchronous>, transform_indices = @transform_2, window_bounds = array<i64: 1, 6>}, {transform_indices = @transform_3, window_bounds = array<i64: 1, 200, 6>}]} {
    %c0 = arith.constant 0 : index
    %c0_0 = arith.constant 0 : index
    %0 = vector.load %arg1[%c0, %c0_0] : memref<800x75xf32, #tpu.memory_space<vmem>>, vector<800x75xf32>
    %c0_1 = arith.constant 0 : index
    %c0_2 = arith.constant 0 : index
    %1 = vector.load %arg2[%c0_1, %c0_2] : memref<75x6xf32, #tpu.memory_space<vmem>>, vector<75x6xf32>
    %cst = arith.constant dense<0.000000e+00> : vector<800x6xf32>
    %2 = tpu.matmul %0, %1, %cst {dimension_numbers = #tpu.dot_dimension_numbers<[1], [0], [0], [1], [0, 0, 1, 1], [], []>} : vector<800x75xf32>, vector<75x6xf32>, vector<800x6xf32> -> vector<800x6xf32>
    %3 = vector.shape_cast %2 : vector<800x6xf32> to vector<1x4x200x6xf32>
    %4 = vector.extract_strided_slice %3 {offsets = [0, 0, 0, 0], sizes = [1, 1, 200, 6], strides = [1, 1, 1, 1]} : vector<1x4x200x6xf32> to vector<1x1x200x6xf32>
    %5 = vector.shape_cast %4 : vector<1x1x200x6xf32> to vector<1x200x6xf32>
    %6 = vector.extract_strided_slice %3 {offsets = [0, 1, 0, 0], sizes = [1, 1, 200, 6], strides = [1, 1, 1, 1]} : vector<1x4x200x6xf32> to vector<1x1x200x6xf32>
    %7 = vector.shape_cast %6 : vector<1x1x200x6xf32> to vector<1x200x6xf32>
    %8 = arith.maximumf %5, %7 : vector<1x200x6xf32>
    %9 = vector.extract_strided_slice %3 {offsets = [0, 2, 0, 0], sizes = [1, 1, 200, 6], strides = [1, 1, 1, 1]} : vector<1x4x200x6xf32> to vector<1x1x200x6xf32>
    %10 = vector.shape_cast %9 : vector<1x1x200x6xf32> to vector<1x200x6xf32>
    %11 = vector.extract_strided_slice %3 {offsets = [0, 3, 0, 0], sizes = [1, 1, 200, 6], strides = [1, 1, 1, 1]} : vector<1x4x200x6xf32> to vector<1x1x200x6xf32>
    %12 = vector.shape_cast %11 : vector<1x1x200x6xf32> to vector<1x200x6xf32>
    %13 = arith.maximumf %10, %12 : vector<1x200x6xf32>
    %14 = arith.maximumf %8, %13 : vector<1x200x6xf32>
    %c0_3 = arith.constant 0 : index
    %c0_4 = arith.constant 0 : index
    %15 = vector.load %arg3[%c0_3, %c0_4] : memref<1x6xf32, #tpu.memory_space<vmem>>, vector<1x6xf32>
    %16 = vector.shape_cast %15 : vector<1x6xf32> to vector<1x1x6xf32>
    %17 = vector.broadcast %16 : vector<1x1x6xf32> to vector<1x200x6xf32>
    %18 = arith.addf %14, %17 : vector<1x200x6xf32>
    %cst_5 = arith.constant 0.000000e+00 : f32
    %19 = vector.broadcast %cst_5 : f32 to vector<1x200x6xf32>
    %20 = arith.maximumf %18, %19 : vector<1x200x6xf32>
    %c0_6 = arith.constant 0 : index
    %c0_7 = arith.constant 0 : index
    %c0_8 = arith.constant 0 : index
    %21 = vector.load %arg4[%c0_6, %c0_7, %c0_8] : memref<1x200x6xf32, #tpu.memory_space<vmem>>, vector<1x200x6xf32>
    tpu.vector_store %arg4[%c0_6, %c0_7, %c0_8], %20 {strides = array<i32>} : memref<1x200x6xf32, #tpu.memory_space<vmem>>, vector<1x200x6xf32>,
    return
  }
  func.func @transform_0(%arg0: i32) -> (i32, i32) {
    %c0_i32 = arith.constant 0 : i32
    %c0_i32_0 = arith.constant 0 : i32
    return %arg0, %c0_i32 : i32, i32
  }
  func.func @transform_1(%arg0: i32) -> (i32, i32) {
    %c0_i32 = arith.constant 0 : i32
    %c0_i32_0 = arith.constant 0 : i32
    %c0_i32_1 = arith.constant 0 : i32
    return %c0_i32, %c0_i32_0 : i32, i32
  }
  func.func @transform_2(%arg0: i32) -> (i32, i32) {
    %c0_i32 = arith.constant 0 : i32
    %c0_i32_0 = arith.constant 0 : i32
    %c0_i32_1 = arith.constant 0 : i32
    return %c0_i32, %c0_i32_0 : i32, i32
  }
  func.func @transform_3(%arg0: i32) -> (i32, i32, i32) {
    %c0_i32 = arith.constant 0 : i32
    %c0_i32_0 = arith.constant 0 : i32
    %c0_i32_1 = arith.constant 0 : i32
    return %arg0, %c0_i32, %c0_i32_0 : i32, i32, i32
  }
}

module attributes {stable_mosaic.version = 11 : i64} {
  func.func @_conv_pool_kernel(%arg0: i32, %arg1: memref<128x150xf32, #tpu.memory_space<vmem>>, %arg2: memref<150x16xf32, #tpu.memory_space<vmem>>, %arg3: memref<1x16xf32, #tpu.memory_space<vmem>>, %arg4: memref<1x32x16xf32, #tpu.memory_space<vmem>>) attributes {dimension_semantics = [#tpu.dimension_semantics<parallel>], iteration_bounds = array<i64: 2>, scalar_prefetch = 0 : i64, scratch_operands = 0 : i64, tpu.core_type = #tpu.core_type<tc>, window_params = [{transform_indices = @transform_0, window_bounds = array<i64: 128, 150>}, {pipeline_mode = #tpu.pipeline_mode<synchronous>, transform_indices = @transform_1, window_bounds = array<i64: 150, 16>}, {pipeline_mode = #tpu.pipeline_mode<synchronous>, transform_indices = @transform_2, window_bounds = array<i64: 1, 16>}, {transform_indices = @transform_3, window_bounds = array<i64: 1, 32, 16>}]} {
    %c0 = arith.constant 0 : index
    %c0_0 = arith.constant 0 : index
    %0 = vector.load %arg1[%c0, %c0_0] : memref<128x150xf32, #tpu.memory_space<vmem>>, vector<128x150xf32>
    %c0_1 = arith.constant 0 : index
    %c0_2 = arith.constant 0 : index
    %1 = vector.load %arg2[%c0_1, %c0_2] : memref<150x16xf32, #tpu.memory_space<vmem>>, vector<150x16xf32>
    %cst = arith.constant dense<0.000000e+00> : vector<128x16xf32>
    %2 = tpu.matmul %0, %1, %cst {dimension_numbers = #tpu.dot_dimension_numbers<[1], [0], [0], [1], [0, 0, 1, 1], [], []>} : vector<128x150xf32>, vector<150x16xf32>, vector<128x16xf32> -> vector<128x16xf32>
    %3 = vector.shape_cast %2 : vector<128x16xf32> to vector<1x4x32x16xf32>
    %4 = vector.extract_strided_slice %3 {offsets = [0, 0, 0, 0], sizes = [1, 1, 32, 16], strides = [1, 1, 1, 1]} : vector<1x4x32x16xf32> to vector<1x1x32x16xf32>
    %5 = vector.shape_cast %4 : vector<1x1x32x16xf32> to vector<1x32x16xf32>
    %6 = vector.extract_strided_slice %3 {offsets = [0, 1, 0, 0], sizes = [1, 1, 32, 16], strides = [1, 1, 1, 1]} : vector<1x4x32x16xf32> to vector<1x1x32x16xf32>
    %7 = vector.shape_cast %6 : vector<1x1x32x16xf32> to vector<1x32x16xf32>
    %8 = arith.maximumf %5, %7 : vector<1x32x16xf32>
    %9 = vector.extract_strided_slice %3 {offsets = [0, 2, 0, 0], sizes = [1, 1, 32, 16], strides = [1, 1, 1, 1]} : vector<1x4x32x16xf32> to vector<1x1x32x16xf32>
    %10 = vector.shape_cast %9 : vector<1x1x32x16xf32> to vector<1x32x16xf32>
    %11 = vector.extract_strided_slice %3 {offsets = [0, 3, 0, 0], sizes = [1, 1, 32, 16], strides = [1, 1, 1, 1]} : vector<1x4x32x16xf32> to vector<1x1x32x16xf32>
    %12 = vector.shape_cast %11 : vector<1x1x32x16xf32> to vector<1x32x16xf32>
    %13 = arith.maximumf %10, %12 : vector<1x32x16xf32>
    %14 = arith.maximumf %8, %13 : vector<1x32x16xf32>
    %c0_3 = arith.constant 0 : index
    %c0_4 = arith.constant 0 : index
    %15 = vector.load %arg3[%c0_3, %c0_4] : memref<1x16xf32, #tpu.memory_space<vmem>>, vector<1x16xf32>
    %16 = vector.shape_cast %15 : vector<1x16xf32> to vector<1x1x16xf32>
    %17 = vector.broadcast %16 : vector<1x1x16xf32> to vector<1x32x16xf32>
    %18 = arith.addf %14, %17 : vector<1x32x16xf32>
    %cst_5 = arith.constant 0.000000e+00 : f32
    %19 = vector.broadcast %cst_5 : f32 to vector<1x32x16xf32>
    %20 = arith.maximumf %18, %19 : vector<1x32x16xf32>
    %c0_6 = arith.constant 0 : index
    %c0_7 = arith.constant 0 : index
    %c0_8 = arith.constant 0 : index
    %21 = vector.load %arg4[%c0_6, %c0_7, %c0_8] : memref<1x32x16xf32, #tpu.memory_space<vmem>>, vector<1x32x16xf32>
    tpu.vector_store %arg4[%c0_6, %c0_7, %c0_8], %20 {strides = array<i32>} : memref<1x32x16xf32, #tpu.memory_space<vmem>>, vector<1x32x16xf32>,
    return
  }
  func.func @transform_0(%arg0: i32) -> (i32, i32) {
    %c0_i32 = arith.constant 0 : i32
    %c0_i32_0 = arith.constant 0 : i32
    return %arg0, %c0_i32 : i32, i32
  }
  func.func @transform_1(%arg0: i32) -> (i32, i32) {
    %c0_i32 = arith.constant 0 : i32
    %c0_i32_0 = arith.constant 0 : i32
    %c0_i32_1 = arith.constant 0 : i32
    return %c0_i32, %c0_i32_0 : i32, i32
  }
  func.func @transform_2(%arg0: i32) -> (i32, i32) {
    %c0_i32 = arith.constant 0 : i32
    %c0_i32_0 = arith.constant 0 : i32
    %c0_i32_1 = arith.constant 0 : i32
    return %c0_i32, %c0_i32_0 : i32, i32
  }
  func.func @transform_3(%arg0: i32) -> (i32, i32, i32) {
    %c0_i32 = arith.constant 0 : i32
    %c0_i32_0 = arith.constant 0 : i32
    %c0_i32_1 = arith.constant 0 : i32
    return %arg0, %c0_i32, %c0_i32_0 : i32, i32, i32
  }
}

module attributes {stable_mosaic.version = 11 : i64} {
  func.func @_fc_fused_kernel(%arg0: i32, %arg1: memref<8x400xf32, #tpu.memory_space<vmem>>, %arg2: memref<400x120xf32, #tpu.memory_space<vmem>>, %arg3: memref<1x120xf32, #tpu.memory_space<vmem>>, %arg4: memref<120x84xf32, #tpu.memory_space<vmem>>, %arg5: memref<1x84xf32, #tpu.memory_space<vmem>>, %arg6: memref<84x128xf32, #tpu.memory_space<vmem>>, %arg7: memref<1x128xf32, #tpu.memory_space<vmem>>, %arg8: memref<8x128xf32, #tpu.memory_space<vmem>>) attributes {dimension_semantics = [#tpu.dimension_semantics<parallel>], iteration_bounds = array<i64: 1>, scalar_prefetch = 0 : i64, scratch_operands = 0 : i64, tpu.core_type = #tpu.core_type<tc>, window_params = [{transform_indices = @transform_0, window_bounds = array<i64: 8, 400>}, {pipeline_mode = #tpu.pipeline_mode<synchronous>, transform_indices = @transform_1, window_bounds = array<i64: 400, 120>}, {pipeline_mode = #tpu.pipeline_mode<synchronous>, transform_indices = @transform_2, window_bounds = array<i64: 1, 120>}, {pipeline_mode = #tpu.pipeline_mode<synchronous>, transform_indices = @transform_3, window_bounds = array<i64: 120, 84>}, {pipeline_mode = #tpu.pipeline_mode<synchronous>, transform_indices = @transform_4, window_bounds = array<i64: 1, 84>}, {pipeline_mode = #tpu.pipeline_mode<synchronous>, transform_indices = @transform_5, window_bounds = array<i64: 84, 128>}, {pipeline_mode = #tpu.pipeline_mode<synchronous>, transform_indices = @transform_6, window_bounds = array<i64: 1, 128>}, {transform_indices = @transform_7, window_bounds = array<i64: 8, 128>}]} {
    %c0 = arith.constant 0 : index
    %c0_0 = arith.constant 0 : index
    %0 = vector.load %arg1[%c0, %c0_0] : memref<8x400xf32, #tpu.memory_space<vmem>>, vector<8x400xf32>
    %c0_1 = arith.constant 0 : index
    %c0_2 = arith.constant 0 : index
    %1 = vector.load %arg2[%c0_1, %c0_2] : memref<400x120xf32, #tpu.memory_space<vmem>>, vector<400x120xf32>
    %cst = arith.constant dense<0.000000e+00> : vector<8x120xf32>
    %2 = tpu.matmul %0, %1, %cst {dimension_numbers = #tpu.dot_dimension_numbers<[1], [0], [0], [1], [0, 0, 1, 1], [], []>} : vector<8x400xf32>, vector<400x120xf32>, vector<8x120xf32> -> vector<8x120xf32>
    %c0_3 = arith.constant 0 : index
    %c0_4 = arith.constant 0 : index
    %3 = vector.load %arg3[%c0_3, %c0_4] : memref<1x120xf32, #tpu.memory_space<vmem>>, vector<1x120xf32>
    %4 = vector.broadcast %3 : vector<1x120xf32> to vector<8x120xf32>
    %5 = arith.addf %2, %4 : vector<8x120xf32>
    %cst_5 = arith.constant 0.000000e+00 : f32
    %6 = vector.broadcast %cst_5 : f32 to vector<8x120xf32>
    %7 = arith.maximumf %5, %6 : vector<8x120xf32>
    %c0_6 = arith.constant 0 : index
    %c0_7 = arith.constant 0 : index
    %8 = vector.load %arg4[%c0_6, %c0_7] : memref<120x84xf32, #tpu.memory_space<vmem>>, vector<120x84xf32>
    %cst_8 = arith.constant dense<0.000000e+00> : vector<8x84xf32>
    %9 = tpu.matmul %7, %8, %cst_8 {dimension_numbers = #tpu.dot_dimension_numbers<[1], [0], [0], [1], [0, 0, 1, 1], [], []>} : vector<8x120xf32>, vector<120x84xf32>, vector<8x84xf32> -> vector<8x84xf32>
    %c0_9 = arith.constant 0 : index
    %c0_10 = arith.constant 0 : index
    %10 = vector.load %arg5[%c0_9, %c0_10] : memref<1x84xf32, #tpu.memory_space<vmem>>, vector<1x84xf32>
    %11 = vector.broadcast %10 : vector<1x84xf32> to vector<8x84xf32>
    %12 = arith.addf %9, %11 : vector<8x84xf32>
    %cst_11 = arith.constant 0.000000e+00 : f32
    %13 = vector.broadcast %cst_11 : f32 to vector<8x84xf32>
    %14 = arith.maximumf %12, %13 : vector<8x84xf32>
    %c0_12 = arith.constant 0 : index
    %c0_13 = arith.constant 0 : index
    %15 = vector.load %arg6[%c0_12, %c0_13] : memref<84x128xf32, #tpu.memory_space<vmem>>, vector<84x128xf32>
    %cst_14 = arith.constant dense<0.000000e+00> : vector<8x128xf32>
    %16 = tpu.matmul %14, %15, %cst_14 {dimension_numbers = #tpu.dot_dimension_numbers<[1], [0], [0], [1], [0, 0, 1, 1], [], []>} : vector<8x84xf32>, vector<84x128xf32>, vector<8x128xf32> -> vector<8x128xf32>
    %c0_15 = arith.constant 0 : index
    %c0_16 = arith.constant 0 : index
    %17 = vector.load %arg7[%c0_15, %c0_16] : memref<1x128xf32, #tpu.memory_space<vmem>>, vector<1x128xf32>
    %18 = vector.broadcast %17 : vector<1x128xf32> to vector<8x128xf32>
    %19 = arith.addf %16, %18 : vector<8x128xf32>
    %c0_17 = arith.constant 0 : index
    %c0_18 = arith.constant 0 : index
    %20 = vector.load %arg8[%c0_17, %c0_18] : memref<8x128xf32, #tpu.memory_space<vmem>>, vector<8x128xf32>
    tpu.vector_store %arg8[%c0_17, %c0_18], %19 {strides = array<i32>} : memref<8x128xf32, #tpu.memory_space<vmem>>, vector<8x128xf32>,
    return
  }
  func.func @transform_0(%arg0: i32) -> (i32, i32) {
    %c0_i32 = arith.constant 0 : i32
    %c0_i32_0 = arith.constant 0 : i32
    return %arg0, %c0_i32 : i32, i32
  }
  func.func @transform_1(%arg0: i32) -> (i32, i32) {
    %c0_i32 = arith.constant 0 : i32
    %c0_i32_0 = arith.constant 0 : i32
    %c0_i32_1 = arith.constant 0 : i32
    return %c0_i32, %c0_i32_0 : i32, i32
  }
  func.func @transform_2(%arg0: i32) -> (i32, i32) {
    %c0_i32 = arith.constant 0 : i32
    %c0_i32_0 = arith.constant 0 : i32
    %c0_i32_1 = arith.constant 0 : i32
    return %c0_i32, %c0_i32_0 : i32, i32
  }
  func.func @transform_3(%arg0: i32) -> (i32, i32) {
    %c0_i32 = arith.constant 0 : i32
    %c0_i32_0 = arith.constant 0 : i32
    %c0_i32_1 = arith.constant 0 : i32
    return %c0_i32, %c0_i32_0 : i32, i32
  }
  func.func @transform_4(%arg0: i32) -> (i32, i32) {
    %c0_i32 = arith.constant 0 : i32
    %c0_i32_0 = arith.constant 0 : i32
    %c0_i32_1 = arith.constant 0 : i32
    return %c0_i32, %c0_i32_0 : i32, i32
  }
  func.func @transform_5(%arg0: i32) -> (i32, i32) {
    %c0_i32 = arith.constant 0 : i32
    %c0_i32_0 = arith.constant 0 : i32
    %c0_i32_1 = arith.constant 0 : i32
    return %c0_i32, %c0_i32_0 : i32, i32
  }
  func.func @transform_6(%arg0: i32) -> (i32, i32) {
    %c0_i32 = arith.constant 0 : i32
    %c0_i32_0 = arith.constant 0 : i32
    %c0_i32_1 = arith.constant 0 : i32
    return %c0_i32, %c0_i32_0 : i32, i32
  }
  func.func @transform_7(%arg0: i32) -> (i32, i32) {
    %c0_i32 = arith.constant 0 : i32
    %c0_i32_0 = arith.constant 0 : i32
    return %arg0, %c0_i32 : i32, i32
  }
}

</mosaic_0001>

<llo_original>
// kernel: net_forward.3
$region0: #{net_forward.3}
  #allocation0 [shape = 'u32[]', space=smem, size = 0x4, offset = 0x4, fixed_abs, tag = 'smem constant byte address 0x4 - core index']
  #allocation1 [shape = 'u32[144,128]{1,0:T(1,128)}', space=vmem, size = 0x12000, scoped, tag = 'internal scratch']
  %s0 = inlined_call_operand.vmem [shape: f32[1600,75], index: 0, kind: input, shape index: {}]
  %s1 = inlined_call_operand.vmem [shape: f32[75,6], index: 1, kind: input, shape index: {}]
  %s2 = inlined_call_operand.vmem [shape: f32[1,6], index: 2, kind: input, shape index: {}]
  %s3 = inlined_call_operand.vmem [shape: f32[2,200,6], index: 3, kind: output, shape index: {}]
  %s4 = sld [smem:[#allocation0]]
  $region45: #{net_forward.3} parent=0
    _
  %s6 = ssub.s32 1, %s4
  %s7 = scalar_select 0, %s6, %s4
  loop: start=0, step=1, limit=4
  $region2: #{net_forward.3} parent=0 // loop_pre_header
    _
  $region3: #{net_forward.3} parent=0 // loop_header
    %s9 = sphi 0, %s13
    %p10 = scmp.ge.s32.totalorder %s9, 4
    %s19 = sphi 0, %s21
    %s22 = sphi 0, %s19
    %s23 = sphi 0, %s22
    %s39 = sphi 0, %s23
    %s43 = sphi 0, %s43
    %s45 = sphi 0, %s43
    %s46 = sphi 0, %s45
    %s60 = sphi 0, %s46
    %s64 = sphi 0, %s64
    %s66 = sphi 0, %s64
    %s67 = sphi 0, %s66
    %s81 = sphi 0, %s67
    %s87 = sphi 0, %s89
    %s90 = sphi 0, %s87
    %s91 = sphi 0, %s90
    %s107 = sphi 0, %s91
  $region4: #{net_forward.3} parent=0 // loop_header_branch
    %12 = sbr.rel (%p10) target = $region8
  $region5: #{net_forward.3} parent=0 // loop_body
    %s14 = ssub.s32 %s9, 1
    %s15 = ssub.s32 %s9, 2
    %s16 = sadd.s32 %s9, 1
    %s17 = ssub.s32 %s9, %s16
    %p18 = scmp.eq.s32.totalorder %s17, 0
    %s20 = sadd.s32 %s19, 1
    %s21 = scalar_select %p18, %s19, %s20
    %p24 = pneg %p18
    %p25 = scmp.eq.s32.totalorder %s9, 1
    %p26 = por %p24, %p25
    %p27 = scmp.ne.s32.totalorder %s19, %s22
    %p28 = scmp.eq.s32.totalorder %s9, 0
    %p29 = por %p27, %p28
    %p30 = scmp.ne.s32.totalorder %s19, %s22
    %p31 = scmp.eq.s32.totalorder %s14, 1
    %p32 = por %p30, %p31
    %p33 = scmp.ne.s32.totalorder %s22, %s23
    %p34 = scmp.eq.s32.totalorder %s14, 0
    %p35 = por %p33, %p34
    %p36 = scmp.ne.s32.totalorder %s22, %s23
    %p37 = scmp.eq.s32.totalorder %s15, 1
    %p38 = por %p36, %p37
    %p40 = scmp.ne.s32.totalorder %s23, %s39
    %p41 = scmp.eq.s32.totalorder %s15, 0
    %p42 = por %p40, %p41
    %s44 = sadd.s32 %s43, 1
    %p47 = scmp.eq.s32.totalorder %s9, 1
    %p48 = scmp.ne.s32.totalorder %s43, %s45
    %p49 = scmp.eq.s32.totalorder %s9, 0
    %p50 = por %p48, %p49
    %p51 = scmp.ne.s32.totalorder %s43, %s45
    %p52 = scmp.eq.s32.totalorder %s14, 1
    %p53 = por %p51, %p52
    %p54 = scmp.ne.s32.totalorder %s45, %s46
    %p55 = scmp.eq.s32.totalorder %s14, 0
    %p56 = por %p54, %p55
    %p57 = scmp.ne.s32.totalorder %s45, %s46
    %p58 = scmp.eq.s32.totalorder %s15, 1
    %p59 = por %p57, %p58
    %p61 = scmp.ne.s32.totalorder %s46, %s60
    %p62 = scmp.eq.s32.totalorder %s15, 0
    %p63 = por %p61, %p62
    %s65 = sadd.s32 %s64, 1
    %p68 = scmp.eq.s32.totalorder %s9, 1
    %p69 = scmp.ne.s32.totalorder %s64, %s66
    %p70 = scmp.eq.s32.totalorder %s9, 0
    %p71 = por %p69, %p70
    %p72 = scmp.ne.s32.totalorder %s64, %s66
    %p73 = scmp.eq.s32.totalorder %s14, 1
    %p74 = por %p72, %p73
    %p75 = scmp.ne.s32.totalorder %s66, %s67
    %p76 = scmp.eq.s32.totalorder %s14, 0
    %p77 = por %p75, %p76
    %p78 = scmp.ne.s32.totalorder %s66, %s67
    %p79 = scmp.eq.s32.totalorder %s15, 1
    %p80 = por %p78, %p79
    %p82 = scmp.ne.s32.totalorder %s67, %s81
    %p83 = scmp.eq.s32.totalorder %s15, 0
    %p84 = por %p82, %p83
    %s85 = ssub.s32 %s9, %s16
    %p86 = scmp.eq.s32.totalorder %s85, 0
    %s88 = sadd.s32 %s87, 1
    %s89 = scalar_select %p86, %s87, %s88
    %p92 = pneg %p86
    %p93 = scmp.eq.s32.totalorder %s9, 1
    %p94 = por %p92, %p93
    %p95 = scmp.ne.s32.totalorder %s87, %s90
    %p96 = scmp.eq.s32.totalorder %s9, 0
    %p97 = por %p95, %p96
    %p98 = scmp.ne.s32.totalorder %s87, %s90
    %p99 = scmp.eq.s32.totalorder %s14, 1
    %p100 = por %p98, %p99
    %p101 = scmp.ne.s32.totalorder %s90, %s91
    %p102 = scmp.eq.s32.totalorder %s14, 0
    %p103 = por %p101, %p102
    %p104 = scmp.ne.s32.totalorder %s90, %s91
    %p105 = scmp.eq.s32.totalorder %s15, 1
    %p106 = por %p104, %p105
    %p108 = scmp.ne.s32.totalorder %s91, %s107
    %p109 = scmp.eq.s32.totalorder %s15, 0
    %p110 = por %p108, %p109
    %p111 = scmp.le.s32.totalorder 1, %s9
    %p112 = scmp.lt.s32.totalorder %s9, 3
    %p113 = pnand %p111, %p112
    %p114 = pneg %p113
    // Predicated region
    $region9: #{net_forward.3} parent=5 // pred_check
      _
    $region10: #{net_forward.3} parent=5 // pred_check_branch
      %116 = sbr.rel (%p113) target = $region12
    $region11: #{net_forward.3} parent=5 // pred_region
      %s117 = ssub.s32 %s9, 1
      // Predicated region
      $region13: #{net_forward.3} parent=11 // pred_check
        %p118 = pneg %p56
      $region14: #{net_forward.3} parent=11 // pred_check_branch
        %120 = sbr.rel (%p118) target = $region16
      $region15: #{net_forward.3} parent=11 // pred_region
        _
      $region16: #{net_forward.3} parent=11 // pred_fallthru
        _
      // Predicated region
      $region17: #{net_forward.3} parent=11 // pred_check
        %p121 = pneg %p77
      $region18: #{net_forward.3} parent=11 // pred_check_branch
        %123 = sbr.rel (%p121) target = $region20
      $region19: #{net_forward.3} parent=11 // pred_region
        _
      $region20: #{net_forward.3} parent=11 // pred_fallthru
        _
    $region12: #{net_forward.3} parent=5 // pred_fallthru
      _
    %p124 = scmp.lt.s32.totalorder %s9, 2
    // Predicated region
    $region21: #{net_forward.3} parent=5 // pred_check
      %p125 = pneg %p124
    $region22: #{net_forward.3} parent=5 // pred_check_branch
      %127 = sbr.rel (%p125) target = $region24
    $region23: #{net_forward.3} parent=5 // pred_region
      // Predicated region
      $region25: #{net_forward.3} parent=23 // pred_check
        %p128 = pneg %p29
      $region26: #{net_forward.3} parent=23 // pred_check_branch
        %130 = sbr.rel (%p128) target = $region28
      $region27: #{net_forward.3} parent=23 // pred_region
        %s131 = smul.u32 100, %s9
        %p132 = scmp.lt.s32.totalorder %s131, 199
        %s133 = scalar_select %p132, %s131, 199
        %s134 = smul.addr %s133, 8
        %s135 = scalar_lea.vmem %s0, %s134
        %s136 = smul.u32 100, %s9
      $region28: #{net_forward.3} parent=23 // pred_fallthru
        _
    $region24: #{net_forward.3} parent=5 // pred_fallthru
      _
    %p137 = scmp.le.s32.totalorder 1, %s9
    %p138 = scmp.lt.s32.totalorder %s9, 3
    %p139 = pnand %p137, %p138
    %p140 = pneg %p139
    // Predicated region
    $region29: #{net_forward.3} parent=5 // pred_check
      _
    $region30: #{net_forward.3} parent=5 // pred_check_branch
      %142 = sbr.rel (%p139) target = $region32
    $region31: #{net_forward.3} parent=5 // pred_region
      %s143 = ssub.s32 %s9, 1
      %s144 = smul.u32 100, %s14
      %p145 = scmp.lt.s32.totalorder %s144, 199
      %s146 = scalar_select %p145, %s144, 199
      %s147 = smul.addr %s146, 8
      %s148 = scalar_lea.vmem %s0, %s147
      %p149 = pneg %p35
      %p150 = pneg %p32
      %p151 = pneg %p56
      %p152 = pneg %p53
      %p153 = pneg %p77
      %p154 = pneg %p74
      %p155 = pneg %p103
      %p156 = pneg %p100
      %p157 = scmp.lt.s32.totalorder %s14, 1
      %s158 = scalar_select %p157, %s14, 1
      %s159 = smul.addr %s158, 25
      %s160 = smul.addr %s159, 8
      %s161 = scalar_lea.vmem %s3, %s160
      %s162 = smul.u32 100, %s14
      %p163 = scmp.lt.s32.totalorder %s162, 199
      %s164 = scalar_select %p163, %s162, 199
      %s165 = smul.addr %s164, 8
      %s166 = scalar_lea.vmem %s0, %s165
      %s167 = smul.u32 100, %s14
      %p168 = scmp.lt.s32.totalorder %s14, 1
      %s169 = scalar_select %p168, %s14, 1
      %s170 = smul.addr %s169, 25
      %s171 = smul.addr %s170, 8
      %s172 = scalar_lea.vmem %s3, %s171
      %v173 = vld [vmem:[%s166] sm:$0xff]
      %v174 = vld [vmem:[%s166 + $0x8] sm:$0xff]
      %v175 = vld [vmem:[%s166 + $0x10] sm:$0xff]
      %v176 = vld [vmem:[%s166 + $0x18] sm:$0xff]
      %v177 = vld [vmem:[%s166 + $0x20] sm:$0xff]
      %v178 = vld [vmem:[%s166 + $0x28] sm:$0xff]
      %v179 = vld [vmem:[%s166 + $0x30] sm:$0xff]
      %v180 = vld [vmem:[%s166 + $0x38] sm:$0xff]
      %v181 = vld [vmem:[%s166 + $0x40] sm:$0xff]
      %v182 = vld [vmem:[%s166 + $0x48] sm:$0xff]
      %v183 = vld [vmem:[%s166 + $0x50] sm:$0xff]
      %v184 = vld [vmem:[%s166 + $0x58] sm:$0xff]
      %v185 = vld [vmem:[%s166 + $0x60] sm:$0xff]
      %v186 = vld [vmem:[%s166 + $0x68] sm:$0xff]
      %v187 = vld [vmem:[%s166 + $0x70] sm:$0xff]
      %v188 = vld [vmem:[%s166 + $0x78] sm:$0xff]
      %v189 = vld [vmem:[%s166 + $0x80] sm:$0xff]
      %v190 = vld [vmem:[%s166 + $0x88] sm:$0xff]
      %v191 = vld [vmem:[%s166 + $0x90] sm:$0xff]
      %v192 = vld [vmem:[%s166 + $0x98] sm:$0xff]
      %v193 = vld [vmem:[%s166 + $0xa0] sm:$0xff]
      %v194 = vld [vmem:[%s166 + $0xa8] sm:$0xff]
      %v195 = vld [vmem:[%s166 + $0xb0] sm:$0xff]
      %v196 = vld [vmem:[%s166 + $0xb8] sm:$0xff]
      %v197 = vld [vmem:[%s166 + $0xc0] sm:$0xff]
      %v198 = vld [vmem:[%s166 + $0xc8] sm:$0xff]
      %v199 = vld [vmem:[%s166 + $0xd0] sm:$0xff]
      %v200 = vld [vmem:[%s166 + $0xd8] sm:$0xff]
      %v201 = vld [vmem:[%s166 + $0xe0] sm:$0xff]
      %v202 = vld [vmem:[%s166 + $0xe8] sm:$0xff]
      %v203 = vld [vmem:[%s166 + $0xf0] sm:$0xff]
      %v204 = vld [vmem:[%s166 + $0xf8] sm:$0xff]
      %v205 = vld [vmem:[%s166 + $0x100] sm:$0xff]
      %v206 = vld [vmem:[%s166 + $0x108] sm:$0xff]
      %v207 = vld [vmem:[%s166 + $0x110] sm:$0xff]
      %v208 = vld [vmem:[%s166 + $0x118] sm:$0xff]
      %v209 = vld [vmem:[%s166 + $0x120] sm:$0xff]
      %v210 = vld [vmem:[%s166 + $0x128] sm:$0xff]
      %v211 = vld [vmem:[%s166 + $0x130] sm:$0xff]
      %v212 = vld [vmem:[%s166 + $0x138] sm:$0xff]
      %v213 = vld [vmem:[%s166 + $0x140] sm:$0xff]
      %v214 = vld [vmem:[%s166 + $0x148] sm:$0xff]
      %v215 = vld [vmem:[%s166 + $0x150] sm:$0xff]
      %v216 = vld [vmem:[%s166 + $0x158] sm:$0xff]
      %v217 = vld [vmem:[%s166 + $0x160] sm:$0xff]
      %v218 = vld [vmem:[%s166 + $0x168] sm:$0xff]
      %v219 = vld [vmem:[%s166 + $0x170] sm:$0xff]
      %v220 = vld [vmem:[%s166 + $0x178] sm:$0xff]
      %v221 = vld [vmem:[%s166 + $0x180] sm:$0xff]
      %v222 = vld [vmem:[%s166 + $0x188] sm:$0xff]
      %v223 = vld [vmem:[%s166 + $0x190] sm:$0xff]
      %v224 = vld [vmem:[%s166 + $0x198] sm:$0xff]
      %v225 = vld [vmem:[%s166 + $0x1a0] sm:$0xff]
      %v226 = vld [vmem:[%s166 + $0x1a8] sm:$0xff]
      %v227 = vld [vmem:[%s166 + $0x1b0] sm:$0xff]
      %v228 = vld [vmem:[%s166 + $0x1b8] sm:$0xff]
      %v229 = vld [vmem:[%s166 + $0x1c0] sm:$0xff]
      %v230 = vld [vmem:[%s166 + $0x1c8] sm:$0xff]
      %v231 = vld [vmem:[%s166 + $0x1d0] sm:$0xff]
      %v232 = vld [vmem:[%s166 + $0x1d8] sm:$0xff]
      %v233 = vld [vmem:[%s166 + $0x1e0] sm:$0xff]
      %v234 = vld [vmem:[%s166 + $0x1e8] sm:$0xff]
      %v235 = vld [vmem:[%s166 + $0x1f0] sm:$0xff]
      %v236 = vld [vmem:[%s166 + $0x1f8] sm:$0xff]
      %v237 = vld [vmem:[%s166 + $0x200] sm:$0xff]
      %v238 = vld [vmem:[%s166 + $0x208] sm:$0xff]
      %v239 = vld [vmem:[%s166 + $0x210] sm:$0xff]
      %v240 = vld [vmem:[%s166 + $0x218] sm:$0xff]
      %v241 = vld [vmem:[%s166 + $0x220] sm:$0xff]
      %v242 = vld [vmem:[%s166 + $0x228] sm:$0xff]
      %v243 = vld [vmem:[%s166 + $0x230] sm:$0xff]
      %v244 = vld [vmem:[%s166 + $0x238] sm:$0xff]
      %v245 = vld [vmem:[%s166 + $0x240] sm:$0xff]
      %v246 = vld [vmem:[%s166 + $0x248] sm:$0xff]
      %v247 = vld [vmem:[%s166 + $0x250] sm:$0xff]
      %v248 = vld [vmem:[%s166 + $0x258] sm:$0xff]
      %v249 = vld [vmem:[%s166 + $0x260] sm:$0xff]
      %v250 = vld [vmem:[%s166 + $0x268] sm:$0xff]
      %v251 = vld [vmem:[%s166 + $0x270] sm:$0xff]
      %v252 = vld [vmem:[%s166 + $0x278] sm:$0xff]
      %v253 = vld [vmem:[%s166 + $0x280] sm:$0xff]
      %v254 = vld [vmem:[%s166 + $0x288] sm:$0xff]
      %v255 = vld [vmem:[%s166 + $0x290] sm:$0xff]
      %v256 = vld [vmem:[%s166 + $0x298] sm:$0xff]
      %v257 = vld [vmem:[%s166 + $0x2a0] sm:$0xff]
      %v258 = vld [vmem:[%s166 + $0x2a8] sm:$0xff]
      %v259 = vld [vmem:[%s166 + $0x2b0] sm:$0xff]
      %v260 = vld [vmem:[%s166 + $0x2b8] sm:$0xff]
      %v261 = vld [vmem:[%s166 + $0x2c0] sm:$0xff]
      %v262 = vld [vmem:[%s166 + $0x2c8] sm:$0xff]
      %v263 = vld [vmem:[%s166 + $0x2d0] sm:$0xff]
      %v264 = vld [vmem:[%s166 + $0x2d8] sm:$0xff]
      %v265 = vld [vmem:[%s166 + $0x2e0] sm:$0xff]
      %v266 = vld [vmem:[%s166 + $0x2e8] sm:$0xff]
      %v267 = vld [vmem:[%s166 + $0x2f0] sm:$0xff]
      %v268 = vld [vmem:[%s166 + $0x2f8] sm:$0xff]
      %v269 = vld [vmem:[%s166 + $0x300] sm:$0xff]
      %v270 = vld [vmem:[%s166 + $0x308] sm:$0xff]
      %v271 = vld [vmem:[%s166 + $0x310] sm:$0xff]
      %v272 = vld [vmem:[%s166 + $0x318] sm:$0xff]
      %v273 = vld [vmem:[%s1] sm:$0xff]
      %v274 = vld [vmem:[%s1 + $0x8] sm:$0xff]
      %v275 = vld [vmem:[%s1 + $0x10] sm:$0xff]
      %v276 = vld [vmem:[%s1 + $0x18] sm:$0xff]
      %v277 = vld [vmem:[%s1 + $0x20] sm:$0xff]
      %v278 = vld [vmem:[%s1 + $0x28] sm:$0xff]
      %v279 = vld [vmem:[%s1 + $0x30] sm:$0xff]
      %v280 = vld [vmem:[%s1 + $0x38] sm:$0xff]
      %v281 = vld [vmem:[%s1 + $0x40] sm:$0xff]
      %v282 = vld [vmem:[%s1 + $0x48] sm:$0x7]
      %vm283 = vcmask 613376
      %v285 = vsel %vm283, %v173, 0
      %v288 = vsel %vm283, %v174, 0
      %v291 = vsel %vm283, %v175, 0
      %v294 = vsel %vm283, %v176, 0
      %v297 = vsel %vm283, %v177, 0
      %v300 = vsel %vm283, %v178, 0
      %v303 = vsel %vm283, %v179, 0
      %v306 = vsel %vm283, %v180, 0
      %v309 = vsel %vm283, %v181, 0
      %v312 = vsel %vm283, %v182, 0
      %v315 = vsel %vm283, %v183, 0
      %v318 = vsel %vm283, %v184, 0
      %v321 = vsel %vm283, %v185, 0
      %v324 = vsel %vm283, %v186, 0
      %v327 = vsel %vm283, %v187, 0
      %v330 = vsel %vm283, %v188, 0
      %v333 = vsel %vm283, %v189, 0
      %v336 = vsel %vm283, %v190, 0
      %v339 = vsel %vm283, %v191, 0
      %v342 = vsel %vm283, %v192, 0
      %v345 = vsel %vm283, %v193, 0
      %v348 = vsel %vm283, %v194, 0
      %v351 = vsel %vm283, %v195, 0
      %v354 = vsel %vm283, %v196, 0
      %v357 = vsel %vm283, %v197, 0
      %v360 = vsel %vm283, %v198, 0
      %v363 = vsel %vm283, %v199, 0
      %v366 = vsel %vm283, %v200, 0
      %v369 = vsel %vm283, %v201, 0
      %v372 = vsel %vm283, %v202, 0
      %v375 = vsel %vm283, %v203, 0
      %v378 = vsel %vm283, %v204, 0
      %v381 = vsel %vm283, %v205, 0
      %v384 = vsel %vm283, %v206, 0
      %v387 = vsel %vm283, %v207, 0
      %v390 = vsel %vm283, %v208, 0
      %v393 = vsel %vm283, %v209, 0
      %v396 = vsel %vm283, %v210, 0
      %v399 = vsel %vm283, %v211, 0
      %v402 = vsel %vm283, %v212, 0
      %v405 = vsel %vm283, %v213, 0
      %v408 = vsel %vm283, %v214, 0
      %v411 = vsel %vm283, %v215, 0
      %v414 = vsel %vm283, %v216, 0
      %v417 = vsel %vm283, %v217, 0
      %v420 = vsel %vm283, %v218, 0
      %v423 = vsel %vm283, %v219, 0
      %v426 = vsel %vm283, %v220, 0
      %v429 = vsel %vm283, %v221, 0
      %v432 = vsel %vm283, %v222, 0
      %v435 = vsel %vm283, %v223, 0
      %v438 = vsel %vm283, %v224, 0
      %v441 = vsel %vm283, %v225, 0
      %v444 = vsel %vm283, %v226, 0
      %v447 = vsel %vm283, %v227, 0
      %v450 = vsel %vm283, %v228, 0
      %v453 = vsel %vm283, %v229, 0
      %v456 = vsel %vm283, %v230, 0
      %v459 = vsel %vm283, %v231, 0
      %v462 = vsel %vm283, %v232, 0
      %v465 = vsel %vm283, %v233, 0
      %v468 = vsel %vm283, %v234, 0
      %v471 = vsel %vm283, %v235, 0
      %v474 = vsel %vm283, %v236, 0
      %v477 = vsel %vm283, %v237, 0
      %v480 = vsel %vm283, %v238, 0
      %v483 = vsel %vm283, %v239, 0
      %v486 = vsel %vm283, %v240, 0
      %v489 = vsel %vm283, %v241, 0
      %v492 = vsel %vm283, %v242, 0
      %v495 = vsel %vm283, %v243, 0
      %v498 = vsel %vm283, %v244, 0
      %v501 = vsel %vm283, %v245, 0
      %v504 = vsel %vm283, %v246, 0
      %v507 = vsel %vm283, %v247, 0
      %v510 = vsel %vm283, %v248, 0
      %v513 = vsel %vm283, %v249, 0
      %v516 = vsel %vm283, %v250, 0
      %v519 = vsel %vm283, %v251, 0
      %v522 = vsel %vm283, %v252, 0
      %v525 = vsel %vm283, %v253, 0
      %v528 = vsel %vm283, %v254, 0
      %v531 = vsel %vm283, %v255, 0
      %v534 = vsel %vm283, %v256, 0
      %v537 = vsel %vm283, %v257, 0
      %v540 = vsel %vm283, %v258, 0
      %v543 = vsel %vm283, %v259, 0
      %v546 = vsel %vm283, %v260, 0
      %v549 = vsel %vm283, %v261, 0
      %v552 = vsel %vm283, %v262, 0
      %v555 = vsel %vm283, %v263, 0
      %v558 = vsel %vm283, %v264, 0
      %v561 = vsel %vm283, %v265, 0
      %v564 = vsel %vm283, %v266, 0
      %v567 = vsel %vm283, %v267, 0
      %v570 = vsel %vm283, %v268, 0
      %v573 = vsel %vm283, %v269, 0
      %v576 = vsel %vm283, %v270, 0
      %v579 = vsel %vm283, %v271, 0
      %v582 = vsel %vm283, %v272, 0
      %vm584 = vcmask 1042432
      %v586 = vsel %vm584, %v282, 0
      %588 = vmatprep.subr.mxu0 0.0
      %589 = vmatpush1.msra.mxu0 0.0
      %590 = vmatprep.subr.mxu0 0.0
      %591 = vmatpush1.msra.mxu0 0.0
      %592 = vmatprep.subr.mxu0 0.0
      %593 = vmatpush1.msra.mxu0 0.0
      %594 = vmatprep.subr.mxu0 0.0
      %595 = vmatpush1.msra.mxu0 0.0
      %596 = vmatprep.subr.mxu0 0.0
      %597 = vmatpush1.msra.mxu0 0.0
      %598 = vmatprep.subr.mxu0 0.0
      %599 = vmatpush1.msra.mxu0 0.0
      %600 = vmatprep.subr.mxu0 0.0
      %601 = vmatpush1.msra.mxu0 %v586
      %602 = vmatprep.subr.mxu0 0.0
      %603 = vmatpush1.msra.mxu0 %v281
      %604 = vmatprep.subr.mxu0 0.0
      %605 = vmatpush1.msra.mxu0 %v280
      %606 = vmatprep.subr.mxu0 0.0
      %607 = vmatpush1.msra.mxu0 %v279
      %608 = vmatprep.subr.mxu0 0.0
      %609 = vmatpush1.msra.mxu0 %v278
      %610 = vmatprep.subr.mxu0 0.0
      %611 = vmatpush1.msra.mxu0 %v277
      %612 = vmatprep.subr.mxu0 0.0
      %613 = vmatpush1.msra.mxu0 %v276
      %614 = vmatprep.subr.mxu0 0.0
      %615 = vmatpush1.msra.mxu0 %v275
      %616 = vmatprep.subr.mxu0 0.0
      %617 = vmatpush1.msra.mxu0 %v274
      %618 = vmatprep.subr.mxu0 0.0
      %619 = vmatpush1.msra.mxu0 %v273
      %620 = vmatprep.subr.mxu0 0.0
      %621 = vmatpush2.msra.mxu0 0.0
      %622 = vmatprep.subr.mxu0 0.0
      %623 = vmatpush2.msra.mxu0 0.0
      %624 = vmatprep.subr.mxu0 0.0
      %625 = vmatpush2.msra.mxu0 0.0
      %626 = vmatprep.subr.mxu0 0.0
      %627 = vmatpush2.msra.mxu0 0.0
      %628 = vmatprep.subr.mxu0 0.0
      %629 = vmatpush2.msra.mxu0 0.0
      %630 = vmatprep.subr.mxu0 0.0
      %631 = vmatpush2.msra.mxu0 0.0
      %632 = vmatprep.subr.mxu0 0.0
      %633 = vmatpush2.msra.mxu0 0.0
      %634 = vmatprep.subr.mxu0 0.0
      %635 = vmatpush2.msra.mxu0 0.0
      %636 = vmatprep.subr.mxu0 0.0
      %637 = vmatpush2.msra.mxu0 0.0
      %638 = vmatprep.subr.mxu0 0.0
      %639 = vmatpush2.msra.mxu0 0.0
      %640 = vmatprep.subr.mxu0 0.0
      %641 = vmatpush2.msra.mxu0 0.0
      %642 = vmatprep.subr.mxu0 0.0
      %643 = vmatpush2.msra.mxu0 0.0
      %644 = vmatprep.subr.mxu0 0.0
      %645 = vmatpush2.msra.mxu0 0.0
      %646 = vmatprep.subr.mxu0 0.0
      %647 = vmatpush2.msra.mxu0 0.0
      %648 = vmatprep.subr.mxu0 0.0
      %649 = vmatpush2.msra.mxu0 0.0
      %650 = vmatprep.subr.mxu0 0.0
      %651 = vmatpush2.msra.mxu0 0.0
      %652 = vmatprep.mubr.f32.mxu0 0.0
      %653 = vmatmul.mubr.f32.gmra.mxu0 %v285
      %v654 = vpop.f32.mrf.mxu0
      %v655 = vadd.f32 0.0, %v654
      %v656 = vpop.f32.mrf.mxu0
      %657 = vmatprep.mubr.f32.mxu0 0.0
      %658 = vmatmul.mubr.f32.gmra.mxu0 %v288
      %v659 = vpop.f32.mrf.mxu0
      %v660 = vadd.f32 0.0, %v659
      %v661 = vpop.f32.mrf.mxu0
      %662 = vmatprep.mubr.f32.mxu0 0.0
      %663 = vmatmul.mubr.f32.gmra.mxu0 %v291
      %v664 = vpop.f32.mrf.mxu0
      %v665 = vadd.f32 0.0, %v664
      %v666 = vpop.f32.mrf.mxu0
      %667 = vmatprep.mubr.f32.mxu0 0.0
      %668 = vmatmul.mubr.f32.gmra.mxu0 %v294
      %v669 = vpop.f32.mrf.mxu0
      %v670 = vadd.f32 0.0, %v669
      %v671 = vpop.f32.mrf.mxu0
      %672 = vmatprep.mubr.f32.mxu0 0.0
      %673 = vmatmul.mubr.f32.gmra.mxu0 %v297
      %v674 = vpop.f32.mrf.mxu0
      %v675 = vadd.f32 0.0, %v674
      %v676 = vpop.f32.mrf.mxu0
      %677 = vmatprep.mubr.f32.mxu0 0.0
      %678 = vmatmul.mubr.f32.gmra.mxu0 %v300
      %v679 = vpop.f32.mrf.mxu0
      %v680 = vadd.f32 0.0, %v679
      %v681 = vpop.f32.mrf.mxu0
      %682 = vmatprep.mubr.f32.mxu0 0.0
      %683 = vmatmul.mubr.f32.gmra.mxu0 %v303
      %v684 = vpop.f32.mrf.mxu0
      %v685 = vadd.f32 0.0, %v684
      %v686 = vpop.f32.mrf.mxu0
      %687 = vmatprep.mubr.f32.mxu0 0.0
      %688 = vmatmul.mubr.f32.gmra.mxu0 %v306
      %v689 = vpop.f32.mrf.mxu0
      %v690 = vadd.f32 0.0, %v689
      %v691 = vpop.f32.mrf.mxu0
      %692 = vmatprep.mubr.f32.mxu0 0.0
      %693 = vmatmul.mubr.f32.gmra.mxu0 %v309
      %v694 = vpop.f32.mrf.mxu0
      %v695 = vadd.f32 0.0, %v694
      %v696 = vpop.f32.mrf.mxu0
      %697 = vmatprep.mubr.f32.mxu0 0.0
      %698 = vmatmul.mubr.f32.gmra.mxu0 %v312
      %v699 = vpop.f32.mrf.mxu0
      %v700 = vadd.f32 0.0, %v699
      %v701 = vpop.f32.mrf.mxu0
      %702 = vmatprep.mubr.f32.mxu0 0.0
      %703 = vmatmul.mubr.f32.gmra.mxu0 %v315
      %v704 = vpop.f32.mrf.mxu0
      %v705 = vadd.f32 0.0, %v704
      %v706 = vpop.f32.mrf.mxu0
      %707 = vmatprep.mubr.f32.mxu0 0.0
      %708 = vmatmul.mubr.f32.gmra.mxu0 %v318
      %v709 = vpop.f32.mrf.mxu0
      %v710 = vadd.f32 0.0, %v709
      %v711 = vpop.f32.mrf.mxu0
      %712 = vmatprep.mubr.f32.mxu0 0.0
      %713 = vmatmul.mubr.f32.gmra.mxu0 %v321
      %v714 = vpop.f32.mrf.mxu0
      %v715 = vadd.f32 0.0, %v714
      %v716 = vpop.f32.mrf.mxu0
      %717 = vmatprep.mubr.f32.mxu0 0.0
      %718 = vmatmul.mubr.f32.gmra.mxu0 %v324
      %v719 = vpop.f32.mrf.mxu0
      %v720 = vadd.f32 0.0, %v719
      %v721 = vpop.f32.mrf.mxu0
      %722 = vmatprep.mubr.f32.mxu0 0.0
      %723 = vmatmul.mubr.f32.gmra.mxu0 %v327
      %v724 = vpop.f32.mrf.mxu0
      %v725 = vadd.f32 0.0, %v724
      %v726 = vpop.f32.mrf.mxu0
      %727 = vmatprep.mubr.f32.mxu0 0.0
      %728 = vmatmul.mubr.f32.gmra.mxu0 %v330
      %v729 = vpop.f32.mrf.mxu0
      %v730 = vadd.f32 0.0, %v729
      %v731 = vpop.f32.mrf.mxu0
      %732 = vmatprep.mubr.f32.mxu0 0.0
      %733 = vmatmul.mubr.f32.gmra.mxu0 %v333
      %v734 = vpop.f32.mrf.mxu0
      %v735 = vadd.f32 0.0, %v734
      %v736 = vpop.f32.mrf.mxu0
      %737 = vmatprep.mubr.f32.mxu0 0.0
      %738 = vmatmul.mubr.f32.gmra.mxu0 %v336
      %v739 = vpop.f32.mrf.mxu0
      %v740 = vadd.f32 0.0, %v739
      %v741 = vpop.f32.mrf.mxu0
      %742 = vmatprep.mubr.f32.mxu0 0.0
      %743 = vmatmul.mubr.f32.gmra.mxu0 %v339
      %v744 = vpop.f32.mrf.mxu0
      %v745 = vadd.f32 0.0, %v744
      %v746 = vpop.f32.mrf.mxu0
      %747 = vmatprep.mubr.f32.mxu0 0.0
      %748 = vmatmul.mubr.f32.gmra.mxu0 %v342
      %v749 = vpop.f32.mrf.mxu0
      %v750 = vadd.f32 0.0, %v749
      %v751 = vpop.f32.mrf.mxu0
      %752 = vmatprep.mubr.f32.mxu0 0.0
      %753 = vmatmul.mubr.f32.gmra.mxu0 %v345
      %v754 = vpop.f32.mrf.mxu0
      %v755 = vadd.f32 0.0, %v754
      %v756 = vpop.f32.mrf.mxu0
      %757 = vmatprep.mubr.f32.mxu0 0.0
      %758 = vmatmul.mubr.f32.gmra.mxu0 %v348
      %v759 = vpop.f32.mrf.mxu0
      %v760 = vadd.f32 0.0, %v759
      %v761 = vpop.f32.mrf.mxu0
      %762 = vmatprep.mubr.f32.mxu0 0.0
      %763 = vmatmul.mubr.f32.gmra.mxu0 %v351
      %v764 = vpop.f32.mrf.mxu0
      %v765 = vadd.f32 0.0, %v764
      %v766 = vpop.f32.mrf.mxu0
      %767 = vmatprep.mubr.f32.mxu0 0.0
      %768 = vmatmul.mubr.f32.gmra.mxu0 %v354
      %v769 = vpop.f32.mrf.mxu0
      %v770 = vadd.f32 0.0, %v769
      %v771 = vpop.f32.mrf.mxu0
      %772 = vmatprep.mubr.f32.mxu0 0.0
      %773 = vmatmul.mubr.f32.gmra.mxu0 %v357
      %v774 = vpop.f32.mrf.mxu0
      %v775 = vadd.f32 0.0, %v774
      %v776 = vpop.f32.mrf.mxu0
      %777 = vmatprep.mubr.f32.mxu0 0.0
      %778 = vmatmul.mubr.f32.gmra.mxu0 %v360
      %v779 = vpop.f32.mrf.mxu0
      %v780 = vadd.f32 0.0, %v779
      %v781 = vpop.f32.mrf.mxu0
      %782 = vmatprep.mubr.f32.mxu0 0.0
      %783 = vmatmul.mubr.f32.gmra.mxu0 %v363
      %v784 = vpop.f32.mrf.mxu0
      %v785 = vadd.f32 0.0, %v784
      %v786 = vpop.f32.mrf.mxu0
      %787 = vmatprep.mubr.f32.mxu0 0.0
      %788 = vmatmul.mubr.f32.gmra.mxu0 %v366
      %v789 = vpop.f32.mrf.mxu0
      %v790 = vadd.f32 0.0, %v789
      %v791 = vpop.f32.mrf.mxu0
      %792 = vmatprep.mubr.f32.mxu0 0.0
      %793 = vmatmul.mubr.f32.gmra.mxu0 %v369
      %v794 = vpop.f32.mrf.mxu0
      %v795 = vadd.f32 0.0, %v794
      %v796 = vpop.f32.mrf.mxu0
      %797 = vmatprep.mubr.f32.mxu0 0.0
      %798 = vmatmul.mubr.f32.gmra.mxu0 %v372
      %v799 = vpop.f32.mrf.mxu0
      %v800 = vadd.f32 0.0, %v799
      %v801 = vpop.f32.mrf.mxu0
      %802 = vmatprep.mubr.f32.mxu0 0.0
      %803 = vmatmul.mubr.f32.gmra.mxu0 %v375
      %v804 = vpop.f32.mrf.mxu0
      %v805 = vadd.f32 0.0, %v804
      %v806 = vpop.f32.mrf.mxu0
      %807 = vmatprep.mubr.f32.mxu0 0.0
      %808 = vmatmul.mubr.f32.gmra.mxu0 %v378
      %v809 = vpop.f32.mrf.mxu0
      %v810 = vadd.f32 0.0, %v809
      %v811 = vpop.f32.mrf.mxu0
      %812 = vmatprep.mubr.f32.mxu0 0.0
      %813 = vmatmul.mubr.f32.gmra.mxu0 %v381
      %v814 = vpop.f32.mrf.mxu0
      %v815 = vadd.f32 0.0, %v814
      %v816 = vpop.f32.mrf.mxu0
      %817 = vmatprep.mubr.f32.mxu0 0.0
      %818 = vmatmul.mubr.f32.gmra.mxu0 %v384
      %v819 = vpop.f32.mrf.mxu0
      %v820 = vadd.f32 0.0, %v819
      %v821 = vpop.f32.mrf.mxu0
      %822 = vmatprep.mubr.f32.mxu0 0.0
      %823 = vmatmul.mubr.f32.gmra.mxu0 %v387
      %v824 = vpop.f32.mrf.mxu0
      %v825 = vadd.f32 0.0, %v824
      %v826 = vpop.f32.mrf.mxu0
      %827 = vmatprep.mubr.f32.mxu0 0.0
      %828 = vmatmul.mubr.f32.gmra.mxu0 %v390
      %v829 = vpop.f32.mrf.mxu0
      %v830 = vadd.f32 0.0, %v829
      %v831 = vpop.f32.mrf.mxu0
      %832 = vmatprep.mubr.f32.mxu0 0.0
      %833 = vmatmul.mubr.f32.gmra.mxu0 %v393
      %v834 = vpop.f32.mrf.mxu0
      %v835 = vadd.f32 0.0, %v834
      %v836 = vpop.f32.mrf.mxu0
      %837 = vmatprep.mubr.f32.mxu0 0.0
      %838 = vmatmul.mubr.f32.gmra.mxu0 %v396
      %v839 = vpop.f32.mrf.mxu0
      %v840 = vadd.f32 0.0, %v839
      %v841 = vpop.f32.mrf.mxu0
      %842 = vmatprep.mubr.f32.mxu0 0.0
      %843 = vmatmul.mubr.f32.gmra.mxu0 %v399
      %v844 = vpop.f32.mrf.mxu0
      %v845 = vadd.f32 0.0, %v844
      %v846 = vpop.f32.mrf.mxu0
      %847 = vmatprep.mubr.f32.mxu0 0.0
      %848 = vmatmul.mubr.f32.gmra.mxu0 %v402
      %v849 = vpop.f32.mrf.mxu0
      %v850 = vadd.f32 0.0, %v849
      %v851 = vpop.f32.mrf.mxu0
      %852 = vmatprep.mubr.f32.mxu0 0.0
      %853 = vmatmul.mubr.f32.gmra.mxu0 %v405
      %v854 = vpop.f32.mrf.mxu0
      %v855 = vadd.f32 0.0, %v854
      %v856 = vpop.f32.mrf.mxu0
      %857 = vmatprep.mubr.f32.mxu0 0.0
      %858 = vmatmul.mubr.f32.gmra.mxu0 %v408
      %v859 = vpop.f32.mrf.mxu0
      %v860 = vadd.f32 0.0, %v859
      %v861 = vpop.f32.mrf.mxu0
      %862 = vmatprep.mubr.f32.mxu0 0.0
      %863 = vmatmul.mubr.f32.gmra.mxu0 %v411
      %v864 = vpop.f32.mrf.mxu0
      %v865 = vadd.f32 0.0, %v864
      %v866 = vpop.f32.mrf.mxu0
      %867 = vmatprep.mubr.f32.mxu0 0.0
      %868 = vmatmul.mubr.f32.gmra.mxu0 %v414
      %v869 = vpop.f32.mrf.mxu0
      %v870 = vadd.f32 0.0, %v869
      %v871 = vpop.f32.mrf.mxu0
      %872 = vmatprep.mubr.f32.mxu0 0.0
      %873 = vmatmul.mubr.f32.gmra.mxu0 %v417
      %v874 = vpop.f32.mrf.mxu0
      %v875 = vadd.f32 0.0, %v874
      %v876 = vpop.f32.mrf.mxu0
      %877 = vmatprep.mubr.f32.mxu0 0.0
      %878 = vmatmul.mubr.f32.gmra.mxu0 %v420
      %v879 = vpop.f32.mrf.mxu0
      %v880 = vadd.f32 0.0, %v879
      %v881 = vpop.f32.mrf.mxu0
      %882 = vmatprep.mubr.f32.mxu0 0.0
      %883 = vmatmul.mubr.f32.gmra.mxu0 %v423
      %v884 = vpop.f32.mrf.mxu0
      %v885 = vadd.f32 0.0, %v884
      %v886 = vpop.f32.mrf.mxu0
      %887 = vmatprep.mubr.f32.mxu0 0.0
      %888 = vmatmul.mubr.f32.gmra.mxu0 %v426
      %v889 = vpop.f32.mrf.mxu0
      %v890 = vadd.f32 0.0, %v889
      %v891 = vpop.f32.mrf.mxu0
      %892 = vmatprep.mubr.f32.mxu0 0.0
      %893 = vmatmul.mubr.f32.gmra.mxu0 %v429
      %v894 = vpop.f32.mrf.mxu0
      %v895 = vadd.f32 0.0, %v894
      %v896 = vpop.f32.mrf.mxu0
      %897 = vmatprep.mubr.f32.mxu0 0.0
      %898 = vmatmul.mubr.f32.gmra.mxu0 %v432
      %v899 = vpop.f32.mrf.mxu0
      %v900 = vadd.f32 0.0, %v899
      %v901 = vpop.f32.mrf.mxu0
      %902 = vmatprep.mubr.f32.mxu0 0.0
      %903 = vmatmul.mubr.f32.gmra.mxu0 %v435
      %v904 = vpop.f32.mrf.mxu0
      %v905 = vadd.f32 0.0, %v904
      %v906 = vpop.f32.mrf.mxu0
      %907 = vmatprep.mubr.f32.mxu0 0.0
      %908 = vmatmul.mubr.f32.gmra.mxu0 %v438
      %v909 = vpop.f32.mrf.mxu0
      %v910 = vadd.f32 0.0, %v909
      %v911 = vpop.f32.mrf.mxu0
      %912 = vmatprep.mubr.f32.mxu0 0.0
      %913 = vmatmul.mubr.f32.gmra.mxu0 %v441
      %v914 = vpop.f32.mrf.mxu0
      %v915 = vadd.f32 0.0, %v914
      %v916 = vpop.f32.mrf.mxu0
      %917 = vmatprep.mubr.f32.mxu0 0.0
      %918 = vmatmul.mubr.f32.gmra.mxu0 %v444
      %v919 = vpop.f32.mrf.mxu0
      %v920 = vadd.f32 0.0, %v919
      %v921 = vpop.f32.mrf.mxu0
      %922 = vmatprep.mubr.f32.mxu0 0.0
      %923 = vmatmul.mubr.f32.gmra.mxu0 %v447
      %v924 = vpop.f32.mrf.mxu0
      %v925 = vadd.f32 0.0, %v924
      %v926 = vpop.f32.mrf.mxu0
      %927 = vmatprep.mubr.f32.mxu0 0.0
      %928 = vmatmul.mubr.f32.gmra.mxu0 %v450
      %v929 = vpop.f32.mrf.mxu0
      %v930 = vadd.f32 0.0, %v929
      %v931 = vpop.f32.mrf.mxu0
      %932 = vmatprep.mubr.f32.mxu0 0.0
      %933 = vmatmul.mubr.f32.gmra.mxu0 %v453
      %v934 = vpop.f32.mrf.mxu0
      %v935 = vadd.f32 0.0, %v934
      %v936 = vpop.f32.mrf.mxu0
      %937 = vmatprep.mubr.f32.mxu0 0.0
      %938 = vmatmul.mubr.f32.gmra.mxu0 %v456
      %v939 = vpop.f32.mrf.mxu0
      %v940 = vadd.f32 0.0, %v939
      %v941 = vpop.f32.mrf.mxu0
      %942 = vmatprep.mubr.f32.mxu0 0.0
      %943 = vmatmul.mubr.f32.gmra.mxu0 %v459
      %v944 = vpop.f32.mrf.mxu0
      %v945 = vadd.f32 0.0, %v944
      %v946 = vpop.f32.mrf.mxu0
      %947 = vmatprep.mubr.f32.mxu0 0.0
      %948 = vmatmul.mubr.f32.gmra.mxu0 %v462
      %v949 = vpop.f32.mrf.mxu0
      %v950 = vadd.f32 0.0, %v949
      %v951 = vpop.f32.mrf.mxu0
      %952 = vmatprep.mubr.f32.mxu0 0.0
      %953 = vmatmul.mubr.f32.gmra.mxu0 %v465
      %v954 = vpop.f32.mrf.mxu0
      %v955 = vadd.f32 0.0, %v954
      %v956 = vpop.f32.mrf.mxu0
      %957 = vmatprep.mubr.f32.mxu0 0.0
      %958 = vmatmul.mubr.f32.gmra.mxu0 %v468
      %v959 = vpop.f32.mrf.mxu0
      %v960 = vadd.f32 0.0, %v959
      %v961 = vpop.f32.mrf.mxu0
      %962 = vmatprep.mubr.f32.mxu0 0.0
      %963 = vmatmul.mubr.f32.gmra.mxu0 %v471
      %v964 = vpop.f32.mrf.mxu0
      %v965 = vadd.f32 0.0, %v964
      %v966 = vpop.f32.mrf.mxu0
      %967 = vmatprep.mubr.f32.mxu0 0.0
      %968 = vmatmul.mubr.f32.gmra.mxu0 %v474
      %v969 = vpop.f32.mrf.mxu0
      %v970 = vadd.f32 0.0, %v969
      %v971 = vpop.f32.mrf.mxu0
      %972 = vmatprep.mubr.f32.mxu0 0.0
      %973 = vmatmul.mubr.f32.gmra.mxu0 %v477
      %v974 = vpop.f32.mrf.mxu0
      %v975 = vadd.f32 0.0, %v974
      %v976 = vpop.f32.mrf.mxu0
      %977 = vmatprep.mubr.f32.mxu0 0.0
      %978 = vmatmul.mubr.f32.gmra.mxu0 %v480
      %v979 = vpop.f32.mrf.mxu0
      %v980 = vadd.f32 0.0, %v979
      %v981 = vpop.f32.mrf.mxu0
      %982 = vmatprep.mubr.f32.mxu0 0.0
      %983 = vmatmul.mubr.f32.gmra.mxu0 %v483
      %v984 = vpop.f32.mrf.mxu0
      %v985 = vadd.f32 0.0, %v984
      %v986 = vpop.f32.mrf.mxu0
      %987 = vmatprep.mubr.f32.mxu0 0.0
      %988 = vmatmul.mubr.f32.gmra.mxu0 %v486
      %v989 = vpop.f32.mrf.mxu0
      %v990 = vadd.f32 0.0, %v989
      %v991 = vpop.f32.mrf.mxu0
      %992 = vmatprep.mubr.f32.mxu0 0.0
      %993 = vmatmul.mubr.f32.gmra.mxu0 %v489
      %v994 = vpop.f32.mrf.mxu0
      %v995 = vadd.f32 0.0, %v994
      %v996 = vpop.f32.mrf.mxu0
      %997 = vmatprep.mubr.f32.mxu0 0.0
      %998 = vmatmul.mubr.f32.gmra.mxu0 %v492
      %v999 = vpop.f32.mrf.mxu0
      %v1000 = vadd.f32 0.0, %v999
      %v1001 = vpop.f32.mrf.mxu0
      %1002 = vmatprep.mubr.f32.mxu0 0.0
      %1003 = vmatmul.mubr.f32.gmra.mxu0 %v495
      %v1004 = vpop.f32.mrf.mxu0
      %v1005 = vadd.f32 0.0, %v1004
      %v1006 = vpop.f32.mrf.mxu0
      %1007 = vmatprep.mubr.f32.mxu0 0.0
      %1008 = vmatmul.mubr.f32.gmra.mxu0 %v498
      %v1009 = vpop.f32.mrf.mxu0
      %v1010 = vadd.f32 0.0, %v1009
      %v1011 = vpop.f32.mrf.mxu0
      %1012 = vmatprep.mubr.f32.mxu0 0.0
      %1013 = vmatmul.mubr.f32.gmra.mxu0 %v501
      %v1014 = vpop.f32.mrf.mxu0
      %v1015 = vadd.f32 0.0, %v1014
      %v1016 = vpop.f32.mrf.mxu0
      %1017 = vmatprep.mubr.f32.mxu0 0.0
      %1018 = vmatmul.mubr.f32.gmra.mxu0 %v504
      %v1019 = vpop.f32.mrf.mxu0
      %v1020 = vadd.f32 0.0, %v1019
      %v1021 = vpop.f32.mrf.mxu0
      %1022 = vmatprep.mubr.f32.mxu0 0.0
      %1023 = vmatmul.mubr.f32.gmra.mxu0 %v507
      %v1024 = vpop.f32.mrf.mxu0
      %v1025 = vadd.f32 0.0, %v1024
      %v1026 = vpop.f32.mrf.mxu0
      %1027 = vmatprep.mubr.f32.mxu0 0.0
      %1028 = vmatmul.mubr.f32.gmra.mxu0 %v510
      %v1029 = vpop.f32.mrf.mxu0
      %v1030 = vadd.f32 0.0, %v1029
      %v1031 = vpop.f32.mrf.mxu0
      %1032 = vmatprep.mubr.f32.mxu0 0.0
      %1033 = vmatmul.mubr.f32.gmra.mxu0 %v513
      %v1034 = vpop.f32.mrf.mxu0
      %v1035 = vadd.f32 0.0, %v1034
      %v1036 = vpop.f32.mrf.mxu0
      %1037 = vmatprep.mubr.f32.mxu0 0.0
      %1038 = vmatmul.mubr.f32.gmra.mxu0 %v516
      %v1039 = vpop.f32.mrf.mxu0
      %v1040 = vadd.f32 0.0, %v1039
      %v1041 = vpop.f32.mrf.mxu0
      %1042 = vmatprep.mubr.f32.mxu0 0.0
      %1043 = vmatmul.mubr.f32.gmra.mxu0 %v519
      %v1044 = vpop.f32.mrf.mxu0
      %v1045 = vadd.f32 0.0, %v1044
      %v1046 = vpop.f32.mrf.mxu0
      %1047 = vmatprep.mubr.f32.mxu0 0.0
      %1048 = vmatmul.mubr.f32.gmra.mxu0 %v522
      %v1049 = vpop.f32.mrf.mxu0
      %v1050 = vadd.f32 0.0, %v1049
      %v1051 = vpop.f32.mrf.mxu0
      %1052 = vmatprep.mubr.f32.mxu0 0.0
      %1053 = vmatmul.mubr.f32.gmra.mxu0 %v525
      %v1054 = vpop.f32.mrf.mxu0
      %v1055 = vadd.f32 0.0, %v1054
      %v1056 = vpop.f32.mrf.mxu0
      %1057 = vmatprep.mubr.f32.mxu0 0.0
      %1058 = vmatmul.mubr.f32.gmra.mxu0 %v528
      %v1059 = vpop.f32.mrf.mxu0
      %v1060 = vadd.f32 0.0, %v1059
      %v1061 = vpop.f32.mrf.mxu0
      %1062 = vmatprep.mubr.f32.mxu0 0.0
      %1063 = vmatmul.mubr.f32.gmra.mxu0 %v531
      %v1064 = vpop.f32.mrf.mxu0
      %v1065 = vadd.f32 0.0, %v1064
      %v1066 = vpop.f32.mrf.mxu0
      %1067 = vmatprep.mubr.f32.mxu0 0.0
      %1068 = vmatmul.mubr.f32.gmra.mxu0 %v534
      %v1069 = vpop.f32.mrf.mxu0
      %v1070 = vadd.f32 0.0, %v1069
      %v1071 = vpop.f32.mrf.mxu0
      %1072 = vmatprep.mubr.f32.mxu0 0.0
      %1073 = vmatmul.mubr.f32.gmra.mxu0 %v537
      %v1074 = vpop.f32.mrf.mxu0
      %v1075 = vadd.f32 0.0, %v1074
      %v1076 = vpop.f32.mrf.mxu0
      %1077 = vmatprep.mubr.f32.mxu0 0.0
      %1078 = vmatmul.mubr.f32.gmra.mxu0 %v540
      %v1079 = vpop.f32.mrf.mxu0
      %v1080 = vadd.f32 0.0, %v1079
      %v1081 = vpop.f32.mrf.mxu0
      %1082 = vmatprep.mubr.f32.mxu0 0.0
      %1083 = vmatmul.mubr.f32.gmra.mxu0 %v543
      %v1084 = vpop.f32.mrf.mxu0
      %v1085 = vadd.f32 0.0, %v1084
      %v1086 = vpop.f32.mrf.mxu0
      %1087 = vmatprep.mubr.f32.mxu0 0.0
      %1088 = vmatmul.mubr.f32.gmra.mxu0 %v546
      %v1089 = vpop.f32.mrf.mxu0
      %v1090 = vadd.f32 0.0, %v1089
      %v1091 = vpop.f32.mrf.mxu0
      %1092 = vmatprep.mubr.f32.mxu0 0.0
      %1093 = vmatmul.mubr.f32.gmra.mxu0 %v549
      %v1094 = vpop.f32.mrf.mxu0
      %v1095 = vadd.f32 0.0, %v1094
      %v1096 = vpop.f32.mrf.mxu0
      %1097 = vmatprep.mubr.f32.mxu0 0.0
      %1098 = vmatmul.mubr.f32.gmra.mxu0 %v552
      %v1099 = vpop.f32.mrf.mxu0
      %v1100 = vadd.f32 0.0, %v1099
      %v1101 = vpop.f32.mrf.mxu0
      %1102 = vmatprep.mubr.f32.mxu0 0.0
      %1103 = vmatmul.mubr.f32.gmra.mxu0 %v555
      %v1104 = vpop.f32.mrf.mxu0
      %v1105 = vadd.f32 0.0, %v1104
      %v1106 = vpop.f32.mrf.mxu0
      %1107 = vmatprep.mubr.f32.mxu0 0.0
      %1108 = vmatmul.mubr.f32.gmra.mxu0 %v558
      %v1109 = vpop.f32.mrf.mxu0
      %v1110 = vadd.f32 0.0, %v1109
      %v1111 = vpop.f32.mrf.mxu0
      %1112 = vmatprep.mubr.f32.mxu0 0.0
      %1113 = vmatmul.mubr.f32.gmra.mxu0 %v561
      %v1114 = vpop.f32.mrf.mxu0
      %v1115 = vadd.f32 0.0, %v1114
      %v1116 = vpop.f32.mrf.mxu0
      %1117 = vmatprep.mubr.f32.mxu0 0.0
      %1118 = vmatmul.mubr.f32.gmra.mxu0 %v564
      %v1119 = vpop.f32.mrf.mxu0
      %v1120 = vadd.f32 0.0, %v1119
      %v1121 = vpop.f32.mrf.mxu0
      %1122 = vmatprep.mubr.f32.mxu0 0.0
      %1123 = vmatmul.mubr.f32.gmra.mxu0 %v567
      %v1124 = vpop.f32.mrf.mxu0
      %v1125 = vadd.f32 0.0, %v1124
      %v1126 = vpop.f32.mrf.mxu0
      %1127 = vmatprep.mubr.f32.mxu0 0.0
      %1128 = vmatmul.mubr.f32.gmra.mxu0 %v570
      %v1129 = vpop.f32.mrf.mxu0
      %v1130 = vadd.f32 0.0, %v1129
      %v1131 = vpop.f32.mrf.mxu0
      %1132 = vmatprep.mubr.f32.mxu0 0.0
      %1133 = vmatmul.mubr.f32.gmra.mxu0 %v573
      %v1134 = vpop.f32.mrf.mxu0
      %v1135 = vadd.f32 0.0, %v1134
      %v1136 = vpop.f32.mrf.mxu0
      %1137 = vmatprep.mubr.f32.mxu0 0.0
      %1138 = vmatmul.mubr.f32.gmra.mxu0 %v576
      %v1139 = vpop.f32.mrf.mxu0
      %v1140 = vadd.f32 0.0, %v1139
      %v1141 = vpop.f32.mrf.mxu0
      %1142 = vmatprep.mubr.f32.mxu0 0.0
      %1143 = vmatmul.mubr.f32.gmra.mxu0 %v579
      %v1144 = vpop.f32.mrf.mxu0
      %v1145 = vadd.f32 0.0, %v1144
      %v1146 = vpop.f32.mrf.mxu0
      %1147 = vmatprep.mubr.f32.mxu0 0.0
      %1148 = vmatmul.mubr.f32.gmra.mxu0 %v582
      %v1149 = vpop.f32.mrf.mxu0
      %v1150 = vadd.f32 0.0, %v1149
      %v1151 = vpop.f32.mrf.mxu0
      %1152 = vdwg.mxu0
      %v1153 = vmax.f32 %v655, %v780
      %v1154 = vmax.f32 %v660, %v785
      %v1155 = vmax.f32 %v665, %v790
      %v1156 = vmax.f32 %v670, %v795
      %v1157 = vmax.f32 %v675, %v800
      %v1158 = vmax.f32 %v680, %v805
      %v1159 = vmax.f32 %v685, %v810
      %v1160 = vmax.f32 %v690, %v815
      %v1161 = vmax.f32 %v695, %v820
      %v1162 = vmax.f32 %v700, %v825
      %v1163 = vmax.f32 %v705, %v830
      %v1164 = vmax.f32 %v710, %v835
      %v1165 = vmax.f32 %v715, %v840
      %v1166 = vmax.f32 %v720, %v845
      %v1167 = vmax.f32 %v725, %v850
      %v1168 = vmax.f32 %v730, %v855
      %v1169 = vmax.f32 %v735, %v860
      %v1170 = vmax.f32 %v740, %v865
      %v1171 = vmax.f32 %v745, %v870
      %v1172 = vmax.f32 %v750, %v875
      %v1173 = vmax.f32 %v755, %v880
      %v1174 = vmax.f32 %v760, %v885
      %v1175 = vmax.f32 %v765, %v890
      %v1176 = vmax.f32 %v770, %v895
      %v1177 = vmax.f32 %v775, %v900
      %v1178 = vmax.f32 %v905, %v1030
      %v1179 = vmax.f32 %v910, %v1035
      %v1180 = vmax.f32 %v915, %v1040
      %v1181 = vmax.f32 %v920, %v1045
      %v1182 = vmax.f32 %v925, %v1050
      %v1183 = vmax.f32 %v930, %v1055
      %v1184 = vmax.f32 %v935, %v1060
      %v1185 = vmax.f32 %v940, %v1065
      %v1186 = vmax.f32 %v945, %v1070
      %v1187 = vmax.f32 %v950, %v1075
      %v1188 = vmax.f32 %v955, %v1080
      %v1189 = vmax.f32 %v960, %v1085
      %v1190 = vmax.f32 %v965, %v1090
      %v1191 = vmax.f32 %v970, %v1095
      %v1192 = vmax.f32 %v975, %v1100
      %v1193 = vmax.f32 %v980, %v1105
      %v1194 = vmax.f32 %v985, %v1110
      %v1195 = vmax.f32 %v990, %v1115
      %v1196 = vmax.f32 %v995, %v1120
      %v1197 = vmax.f32 %v1000, %v1125
      %v1198 = vmax.f32 %v1005, %v1130
      %v1199 = vmax.f32 %v1010, %v1135
      %v1200 = vmax.f32 %v1015, %v1140
      %v1201 = vmax.f32 %v1020, %v1145
      %v1202 = vmax.f32 %v1025, %v1150
      %v1203 = vmax.f32 %v1153, %v1178
      %v1204 = vmax.f32 %v1154, %v1179
      %v1205 = vmax.f32 %v1155, %v1180
      %v1206 = vmax.f32 %v1156, %v1181
      %v1207 = vmax.f32 %v1157, %v1182
      %v1208 = vmax.f32 %v1158, %v1183
      %v1209 = vmax.f32 %v1159, %v1184
      %v1210 = vmax.f32 %v1160, %v1185
      %v1211 = vmax.f32 %v1161, %v1186
      %v1212 = vmax.f32 %v1162, %v1187
      %v1213 = vmax.f32 %v1163, %v1188
      %v1214 = vmax.f32 %v1164, %v1189
      %v1215 = vmax.f32 %v1165, %v1190
      %v1216 = vmax.f32 %v1166, %v1191
      %v1217 = vmax.f32 %v1167, %v1192
      %v1218 = vmax.f32 %v1168, %v1193
      %v1219 = vmax.f32 %v1169, %v1194
      %v1220 = vmax.f32 %v1170, %v1195
      %v1221 = vmax.f32 %v1171, %v1196
      %v1222 = vmax.f32 %v1172, %v1197
      %v1223 = vmax.f32 %v1173, %v1198
      %v1224 = vmax.f32 %v1174, %v1199
      %v1225 = vmax.f32 %v1175, %v1200
      %v1226 = vmax.f32 %v1176, %v1201
      %v1227 = vmax.f32 %v1177, %v1202
      %v1228 = vld [vmem:[%s2] sm:$0x1]
      %v1230 = vlaneseq
      %v1231 = vshrl.u32 %v1230, 7
      %v1232 = vsub.s32 0, %v1231
      %v1233 = vrot.slane %v1228, %v1232
      %v1235 = vadd.f32 %v1203, %v1233
      %v1236 = vadd.f32 %v1204, %v1233
      %v1237 = vadd.f32 %v1205, %v1233
      %v1238 = vadd.f32 %v1206, %v1233
      %v1239 = vadd.f32 %v1207, %v1233
      %v1240 = vadd.f32 %v1208, %v1233
      %v1241 = vadd.f32 %v1209, %v1233
      %v1242 = vadd.f32 %v1210, %v1233
      %v1243 = vadd.f32 %v1211, %v1233
      %v1244 = vadd.f32 %v1212, %v1233
      %v1245 = vadd.f32 %v1213, %v1233
      %v1246 = vadd.f32 %v1214, %v1233
      %v1247 = vadd.f32 %v1215, %v1233
      %v1248 = vadd.f32 %v1216, %v1233
      %v1249 = vadd.f32 %v1217, %v1233
      %v1250 = vadd.f32 %v1218, %v1233
      %v1251 = vadd.f32 %v1219, %v1233
      %v1252 = vadd.f32 %v1220, %v1233
      %v1253 = vadd.f32 %v1221, %v1233
      %v1254 = vadd.f32 %v1222, %v1233
      %v1255 = vadd.f32 %v1223, %v1233
      %v1256 = vadd.f32 %v1224, %v1233
      %v1257 = vadd.f32 %v1225, %v1233
      %v1258 = vadd.f32 %v1226, %v1233
      %v1259 = vadd.f32 %v1227, %v1233
      %v1260 = vmax.f32 %v1235, 0.0
      %v1261 = vmax.f32 %v1236, 0.0
      %v1262 = vmax.f32 %v1237, 0.0
      %v1263 = vmax.f32 %v1238, 0.0
      %v1264 = vmax.f32 %v1239, 0.0
      %v1265 = vmax.f32 %v1240, 0.0
      %v1266 = vmax.f32 %v1241, 0.0
      %v1267 = vmax.f32 %v1242, 0.0
      %v1268 = vmax.f32 %v1243, 0.0
      %v1269 = vmax.f32 %v1244, 0.0
      %v1270 = vmax.f32 %v1245, 0.0
      %v1271 = vmax.f32 %v1246, 0.0
      %v1272 = vmax.f32 %v1247, 0.0
      %v1273 = vmax.f32 %v1248, 0.0
      %v1274 = vmax.f32 %v1249, 0.0
      %v1275 = vmax.f32 %v1250, 0.0
      %v1276 = vmax.f32 %v1251, 0.0
      %v1277 = vmax.f32 %v1252, 0.0
      %v1278 = vmax.f32 %v1253, 0.0
      %v1279 = vmax.f32 %v1254, 0.0
      %v1280 = vmax.f32 %v1255, 0.0
      %v1281 = vmax.f32 %v1256, 0.0
      %v1282 = vmax.f32 %v1257, 0.0
      %v1283 = vmax.f32 %v1258, 0.0
      %v1284 = vmax.f32 %v1259, 0.0
      %vm1285 = vcmask 48128
      %1286 = vst.msk [vmem:[%s172] sm:$0xff] %vm1285, %v1260
      %1287 = vst.msk [vmem:[%s172 + $0x8] sm:$0xff] %vm1285, %v1261
      %1288 = vst.msk [vmem:[%s172 + $0x10] sm:$0xff] %vm1285, %v1262
      %1289 = vst.msk [vmem:[%s172 + $0x18] sm:$0xff] %vm1285, %v1263
      %1290 = vst.msk [vmem:[%s172 + $0x20] sm:$0xff] %vm1285, %v1264
      %1291 = vst.msk [vmem:[%s172 + $0x28] sm:$0xff] %vm1285, %v1265
      %1292 = vst.msk [vmem:[%s172 + $0x30] sm:$0xff] %vm1285, %v1266
      %1293 = vst.msk [vmem:[%s172 + $0x38] sm:$0xff] %vm1285, %v1267
      %1294 = vst.msk [vmem:[%s172 + $0x40] sm:$0xff] %vm1285, %v1268
      %1295 = vst.msk [vmem:[%s172 + $0x48] sm:$0xff] %vm1285, %v1269
      %1296 = vst.msk [vmem:[%s172 + $0x50] sm:$0xff] %vm1285, %v1270
      %1297 = vst.msk [vmem:[%s172 + $0x58] sm:$0xff] %vm1285, %v1271
      %1298 = vst.msk [vmem:[%s172 + $0x60] sm:$0xff] %vm1285, %v1272
      %1299 = vst.msk [vmem:[%s172 + $0x68] sm:$0xff] %vm1285, %v1273
      %1300 = vst.msk [vmem:[%s172 + $0x70] sm:$0xff] %vm1285, %v1274
      %1301 = vst.msk [vmem:[%s172 + $0x78] sm:$0xff] %vm1285, %v1275
      %1302 = vst.msk [vmem:[%s172 + $0x80] sm:$0xff] %vm1285, %v1276
      %1303 = vst.msk [vmem:[%s172 + $0x88] sm:$0xff] %vm1285, %v1277
      %1304 = vst.msk [vmem:[%s172 + $0x90] sm:$0xff] %vm1285, %v1278
      %1305 = vst.msk [vmem:[%s172 + $0x98] sm:$0xff] %vm1285, %v1279
      %1306 = vst.msk [vmem:[%s172 + $0xa0] sm:$0xff] %vm1285, %v1280
      %1307 = vst.msk [vmem:[%s172 + $0xa8] sm:$0xff] %vm1285, %v1281
      %1308 = vst.msk [vmem:[%s172 + $0xb0] sm:$0xff] %vm1285, %v1282
      %1309 = vst.msk [vmem:[%s172 + $0xb8] sm:$0xff] %vm1285, %v1283
      %1310 = vst.msk [vmem:[%s172 + $0xc0] sm:$0xff] %vm1285, %v1284
      %p1311 = scmp.lt.s32.totalorder %s14, 1
      %s1312 = scalar_select %p1311, %s14, 1
      %s1313 = smul.addr %s1312, 25
      %s1314 = smul.addr %s1313, 8
      %s1315 = scalar_lea.vmem %s3, %s1314
      // Predicated region
      $region33: #{net_forward.3} parent=31 // pred_check
        %p1316 = pneg %p100
      $region34: #{net_forward.3} parent=31 // pred_check_branch
        %1318 = sbr.rel (%p1316) target = $region36
      $region35: #{net_forward.3} parent=31 // pred_region
        _
      $region36: #{net_forward.3} parent=31 // pred_fallthru
        _
    $region32: #{net_forward.3} parent=5 // pred_fallthru
      _
    %p1319 = scmp.le.s32.totalorder 2, %s9
    // Predicated region
    $region37: #{net_forward.3} parent=5 // pred_check
      %p1320 = pneg %p1319
    $region38: #{net_forward.3} parent=5 // pred_check_branch
      %1322 = sbr.rel (%p1320) target = $region40
    $region39: #{net_forward.3} parent=5 // pred_region
      %s1323 = ssub.s32 %s9, 2
      // Predicated region
      $region41: #{net_forward.3} parent=39 // pred_check
        %p1324 = pneg %p106
      $region42: #{net_forward.3} parent=39 // pred_check_branch
        %1326 = sbr.rel (%p1324) target = $region44
      $region43: #{net_forward.3} parent=39 // pred_region
        %p1327 = scmp.lt.s32.totalorder %s15, 1
        %s1328 = scalar_select %p1327, %s15, 1
        %s1329 = smul.addr %s1328, 25
        %s1330 = smul.addr %s1329, 8
        %s1331 = scalar_lea.vmem %s3, %s1330
      $region44: #{net_forward.3} parent=39 // pred_fallthru
        _
    $region40: #{net_forward.3} parent=5 // pred_fallthru
      _
  $region6: #{net_forward.3} parent=0 // loop_footer
    %s13 = sadd.s32 1, %s9
  $region7: #{net_forward.3} parent=0 // loop_footer_branch
    %8 = sbr.rel target = $region3
  $region8: #{net_forward.3} parent=0 // loop_exit
    _

// kernel: net_forward.4
$region0: #{net_forward.4}
  #allocation0 [shape = 'u32[]', space=smem, size = 0x4, offset = 0x4, fixed_abs, tag = 'smem constant byte address 0x4 - core index']
  #allocation1 [shape = 'u32[144,128]{1,0:T(1,128)}', space=vmem, size = 0x12000, scoped, tag = 'internal scratch']
  %s0 = inlined_call_operand.vmem [shape: f32[256,150], index: 0, kind: input, shape index: {}]
  %s1 = inlined_call_operand.vmem [shape: f32[150,16], index: 1, kind: input, shape index: {}]
  %s2 = inlined_call_operand.vmem [shape: f32[1,16], index: 2, kind: input, shape index: {}]
  %s3 = inlined_call_operand.vmem [shape: f32[2,32,16], index: 3, kind: output, shape index: {}]
  %s4 = sld [smem:[#allocation0]]
  $region45: #{net_forward.4} parent=0
    _
  %s6 = ssub.s32 1, %s4
  %s7 = scalar_select 0, %s6, %s4
  loop: start=0, step=1, limit=4
  $region2: #{net_forward.4} parent=0 // loop_pre_header
    _
  $region3: #{net_forward.4} parent=0 // loop_header
    %s9 = sphi 0, %s13
    %p10 = scmp.ge.s32.totalorder %s9, 4
    %s19 = sphi 0, %s21
    %s22 = sphi 0, %s19
    %s23 = sphi 0, %s22
    %s39 = sphi 0, %s23
    %s43 = sphi 0, %s43
    %s45 = sphi 0, %s43
    %s46 = sphi 0, %s45
    %s60 = sphi 0, %s46
    %s64 = sphi 0, %s64
    %s66 = sphi 0, %s64
    %s67 = sphi 0, %s66
    %s81 = sphi 0, %s67
    %s87 = sphi 0, %s89
    %s90 = sphi 0, %s87
    %s91 = sphi 0, %s90
    %s107 = sphi 0, %s91
  $region4: #{net_forward.4} parent=0 // loop_header_branch
    %12 = sbr.rel (%p10) target = $region8
  $region5: #{net_forward.4} parent=0 // loop_body
    %s14 = ssub.s32 %s9, 1
    %s15 = ssub.s32 %s9, 2
    %s16 = sadd.s32 %s9, 1
    %s17 = ssub.s32 %s9, %s16
    %p18 = scmp.eq.s32.totalorder %s17, 0
    %s20 = sadd.s32 %s19, 1
    %s21 = scalar_select %p18, %s19, %s20
    %p24 = pneg %p18
    %p25 = scmp.eq.s32.totalorder %s9, 1
    %p26 = por %p24, %p25
    %p27 = scmp.ne.s32.totalorder %s19, %s22
    %p28 = scmp.eq.s32.totalorder %s9, 0
    %p29 = por %p27, %p28
    %p30 = scmp.ne.s32.totalorder %s19, %s22
    %p31 = scmp.eq.s32.totalorder %s14, 1
    %p32 = por %p30, %p31
    %p33 = scmp.ne.s32.totalorder %s22, %s23
    %p34 = scmp.eq.s32.totalorder %s14, 0
    %p35 = por %p33, %p34
    %p36 = scmp.ne.s32.totalorder %s22, %s23
    %p37 = scmp.eq.s32.totalorder %s15, 1
    %p38 = por %p36, %p37
    %p40 = scmp.ne.s32.totalorder %s23, %s39
    %p41 = scmp.eq.s32.totalorder %s15, 0
    %p42 = por %p40, %p41
    %s44 = sadd.s32 %s43, 1
    %p47 = scmp.eq.s32.totalorder %s9, 1
    %p48 = scmp.ne.s32.totalorder %s43, %s45
    %p49 = scmp.eq.s32.totalorder %s9, 0
    %p50 = por %p48, %p49
    %p51 = scmp.ne.s32.totalorder %s43, %s45
    %p52 = scmp.eq.s32.totalorder %s14, 1
    %p53 = por %p51, %p52
    %p54 = scmp.ne.s32.totalorder %s45, %s46
    %p55 = scmp.eq.s32.totalorder %s14, 0
    %p56 = por %p54, %p55
    %p57 = scmp.ne.s32.totalorder %s45, %s46
    %p58 = scmp.eq.s32.totalorder %s15, 1
    %p59 = por %p57, %p58
    %p61 = scmp.ne.s32.totalorder %s46, %s60
    %p62 = scmp.eq.s32.totalorder %s15, 0
    %p63 = por %p61, %p62
    %s65 = sadd.s32 %s64, 1
    %p68 = scmp.eq.s32.totalorder %s9, 1
    %p69 = scmp.ne.s32.totalorder %s64, %s66
    %p70 = scmp.eq.s32.totalorder %s9, 0
    %p71 = por %p69, %p70
    %p72 = scmp.ne.s32.totalorder %s64, %s66
    %p73 = scmp.eq.s32.totalorder %s14, 1
    %p74 = por %p72, %p73
    %p75 = scmp.ne.s32.totalorder %s66, %s67
    %p76 = scmp.eq.s32.totalorder %s14, 0
    %p77 = por %p75, %p76
    %p78 = scmp.ne.s32.totalorder %s66, %s67
    %p79 = scmp.eq.s32.totalorder %s15, 1
    %p80 = por %p78, %p79
    %p82 = scmp.ne.s32.totalorder %s67, %s81
    %p83 = scmp.eq.s32.totalorder %s15, 0
    %p84 = por %p82, %p83
    %s85 = ssub.s32 %s9, %s16
    %p86 = scmp.eq.s32.totalorder %s85, 0
    %s88 = sadd.s32 %s87, 1
    %s89 = scalar_select %p86, %s87, %s88
    %p92 = pneg %p86
    %p93 = scmp.eq.s32.totalorder %s9, 1
    %p94 = por %p92, %p93
    %p95 = scmp.ne.s32.totalorder %s87, %s90
    %p96 = scmp.eq.s32.totalorder %s9, 0
    %p97 = por %p95, %p96
    %p98 = scmp.ne.s32.totalorder %s87, %s90
    %p99 = scmp.eq.s32.totalorder %s14, 1
    %p100 = por %p98, %p99
    %p101 = scmp.ne.s32.totalorder %s90, %s91
    %p102 = scmp.eq.s32.totalorder %s14, 0
    %p103 = por %p101, %p102
    %p104 = scmp.ne.s32.totalorder %s90, %s91
    %p105 = scmp.eq.s32.totalorder %s15, 1
    %p106 = por %p104, %p105
    %p108 = scmp.ne.s32.totalorder %s91, %s107
    %p109 = scmp.eq.s32.totalorder %s15, 0
    %p110 = por %p108, %p109
    %p111 = scmp.le.s32.totalorder 1, %s9
    %p112 = scmp.lt.s32.totalorder %s9, 3
    %p113 = pnand %p111, %p112
    %p114 = pneg %p113
    // Predicated region
    $region9: #{net_forward.4} parent=5 // pred_check
      _
    $region10: #{net_forward.4} parent=5 // pred_check_branch
      %116 = sbr.rel (%p113) target = $region12
    $region11: #{net_forward.4} parent=5 // pred_region
      %s117 = ssub.s32 %s9, 1
      // Predicated region
      $region13: #{net_forward.4} parent=11 // pred_check
        %p118 = pneg %p56
      $region14: #{net_forward.4} parent=11 // pred_check_branch
        %120 = sbr.rel (%p118) target = $region16
      $region15: #{net_forward.4} parent=11 // pred_region
        _
      $region16: #{net_forward.4} parent=11 // pred_fallthru
        _
      // Predicated region
      $region17: #{net_forward.4} parent=11 // pred_check
        %p121 = pneg %p77
      $region18: #{net_forward.4} parent=11 // pred_check_branch
        %123 = sbr.rel (%p121) target = $region20
      $region19: #{net_forward.4} parent=11 // pred_region
        _
      $region20: #{net_forward.4} parent=11 // pred_fallthru
        _
    $region12: #{net_forward.4} parent=5 // pred_fallthru
      _
    %p124 = scmp.lt.s32.totalorder %s9, 2
    // Predicated region
    $region21: #{net_forward.4} parent=5 // pred_check
      %p125 = pneg %p124
    $region22: #{net_forward.4} parent=5 // pred_check_branch
      %127 = sbr.rel (%p125) target = $region24
    $region23: #{net_forward.4} parent=5 // pred_region
      // Predicated region
      $region25: #{net_forward.4} parent=23 // pred_check
        %p128 = pneg %p29
      $region26: #{net_forward.4} parent=23 // pred_check_branch
        %130 = sbr.rel (%p128) target = $region28
      $region27: #{net_forward.4} parent=23 // pred_region
        %s131 = smul.u32 16, %s9
        %p132 = scmp.lt.s32.totalorder %s131, 31
        %s133 = scalar_select %p132, %s131, 31
        %s134 = smul.addr %s133, 2
        %s135 = smul.addr %s134, 8
        %s136 = scalar_lea.vmem %s0, %s135
        %s137 = smul.u32 16, %s9
      $region28: #{net_forward.4} parent=23 // pred_fallthru
        _
    $region24: #{net_forward.4} parent=5 // pred_fallthru
      _
    %p138 = scmp.le.s32.totalorder 1, %s9
    %p139 = scmp.lt.s32.totalorder %s9, 3
    %p140 = pnand %p138, %p139
    %p141 = pneg %p140
    // Predicated region
    $region29: #{net_forward.4} parent=5 // pred_check
      _
    $region30: #{net_forward.4} parent=5 // pred_check_branch
      %143 = sbr.rel (%p140) target = $region32
    $region31: #{net_forward.4} parent=5 // pred_region
      %s144 = ssub.s32 %s9, 1
      %s145 = smul.u32 16, %s14
      %p146 = scmp.lt.s32.totalorder %s145, 31
      %s147 = scalar_select %p146, %s145, 31
      %s148 = smul.addr %s147, 2
      %s149 = smul.addr %s148, 8
      %s150 = scalar_lea.vmem %s0, %s149
      %p151 = pneg %p35
      %p152 = pneg %p32
      %p153 = pneg %p56
      %p154 = pneg %p53
      %p155 = pneg %p77
      %p156 = pneg %p74
      %p157 = pneg %p103
      %p158 = pneg %p100
      %p159 = scmp.lt.s32.totalorder %s14, 1
      %s160 = scalar_select %p159, %s14, 1
      %s161 = smul.addr %s160, 4
      %s162 = smul.addr %s161, 8
      %s163 = scalar_lea.vmem %s3, %s162
      %s164 = smul.u32 16, %s14
      %p165 = scmp.lt.s32.totalorder %s164, 31
      %s166 = scalar_select %p165, %s164, 31
      %s167 = smul.addr %s166, 2
      %s168 = smul.addr %s167, 8
      %s169 = scalar_lea.vmem %s0, %s168
      %s170 = smul.u32 16, %s14
      %p171 = scmp.lt.s32.totalorder %s14, 1
      %s172 = scalar_select %p171, %s14, 1
      %s173 = smul.addr %s172, 4
      %s174 = smul.addr %s173, 8
      %s175 = scalar_lea.vmem %s3, %s174
      %v176 = vld [vmem:[%s169] sm:$0xff]
      %v177 = vld [vmem:[%s169 + $0x8] sm:$0xff]
      %v178 = vld [vmem:[%s169 + $0x10] sm:$0xff]
      %v179 = vld [vmem:[%s169 + $0x18] sm:$0xff]
      %v180 = vld [vmem:[%s169 + $0x20] sm:$0xff]
      %v181 = vld [vmem:[%s169 + $0x28] sm:$0xff]
      %v182 = vld [vmem:[%s169 + $0x30] sm:$0xff]
      %v183 = vld [vmem:[%s169 + $0x38] sm:$0xff]
      %v184 = vld [vmem:[%s169 + $0x40] sm:$0xff]
      %v185 = vld [vmem:[%s169 + $0x48] sm:$0xff]
      %v186 = vld [vmem:[%s169 + $0x50] sm:$0xff]
      %v187 = vld [vmem:[%s169 + $0x58] sm:$0xff]
      %v188 = vld [vmem:[%s169 + $0x60] sm:$0xff]
      %v189 = vld [vmem:[%s169 + $0x68] sm:$0xff]
      %v190 = vld [vmem:[%s169 + $0x70] sm:$0xff]
      %v191 = vld [vmem:[%s169 + $0x78] sm:$0xff]
      %v192 = vld [vmem:[%s169 + $0x80] sm:$0xff]
      %v193 = vld [vmem:[%s169 + $0x88] sm:$0xff]
      %v194 = vld [vmem:[%s169 + $0x90] sm:$0xff]
      %v195 = vld [vmem:[%s169 + $0x98] sm:$0xff]
      %v196 = vld [vmem:[%s169 + $0xa0] sm:$0xff]
      %v197 = vld [vmem:[%s169 + $0xa8] sm:$0xff]
      %v198 = vld [vmem:[%s169 + $0xb0] sm:$0xff]
      %v199 = vld [vmem:[%s169 + $0xb8] sm:$0xff]
      %v200 = vld [vmem:[%s169 + $0xc0] sm:$0xff]
      %v201 = vld [vmem:[%s169 + $0xc8] sm:$0xff]
      %v202 = vld [vmem:[%s169 + $0xd0] sm:$0xff]
      %v203 = vld [vmem:[%s169 + $0xd8] sm:$0xff]
      %v204 = vld [vmem:[%s169 + $0xe0] sm:$0xff]
      %v205 = vld [vmem:[%s169 + $0xe8] sm:$0xff]
      %v206 = vld [vmem:[%s169 + $0xf0] sm:$0xff]
      %v207 = vld [vmem:[%s169 + $0xf8] sm:$0xff]
      %v208 = vld [vmem:[%s1] sm:$0xff]
      %v209 = vld [vmem:[%s1 + $0x8] sm:$0xff]
      %v210 = vld [vmem:[%s1 + $0x10] sm:$0xff]
      %v211 = vld [vmem:[%s1 + $0x18] sm:$0xff]
      %v212 = vld [vmem:[%s1 + $0x20] sm:$0xff]
      %v213 = vld [vmem:[%s1 + $0x28] sm:$0xff]
      %v214 = vld [vmem:[%s1 + $0x30] sm:$0xff]
      %v215 = vld [vmem:[%s1 + $0x38] sm:$0xff]
      %v216 = vld [vmem:[%s1 + $0x40] sm:$0xff]
      %v217 = vld [vmem:[%s1 + $0x48] sm:$0xff]
      %v218 = vld [vmem:[%s1 + $0x50] sm:$0xff]
      %v219 = vld [vmem:[%s1 + $0x58] sm:$0xff]
      %v220 = vld [vmem:[%s1 + $0x60] sm:$0xff]
      %v221 = vld [vmem:[%s1 + $0x68] sm:$0xff]
      %v222 = vld [vmem:[%s1 + $0x70] sm:$0xff]
      %v223 = vld [vmem:[%s1 + $0x78] sm:$0xff]
      %v224 = vld [vmem:[%s1 + $0x80] sm:$0xff]
      %v225 = vld [vmem:[%s1 + $0x88] sm:$0xff]
      %v226 = vld [vmem:[%s1 + $0x90] sm:$0x3f]
      %vm227 = vcmask 179200
      %v229 = vsel %vm227, %v177, 0
      %v232 = vsel %vm227, %v179, 0
      %v235 = vsel %vm227, %v181, 0
      %v238 = vsel %vm227, %v183, 0
      %v241 = vsel %vm227, %v185, 0
      %v244 = vsel %vm227, %v187, 0
      %v247 = vsel %vm227, %v189, 0
      %v250 = vsel %vm227, %v191, 0
      %v253 = vsel %vm227, %v193, 0
      %v256 = vsel %vm227, %v195, 0
      %v259 = vsel %vm227, %v197, 0
      %v262 = vsel %vm227, %v199, 0
      %v265 = vsel %vm227, %v201, 0
      %v268 = vsel %vm227, %v203, 0
      %v271 = vsel %vm227, %v205, 0
      %v274 = vsel %vm227, %v207, 0
      %vm276 = vcmask 1045504
      %v278 = vsel %vm276, %v226, 0
      %280 = vmatprep.subr.mxu0 0.0
      %281 = vmatpush1.msra.mxu0 %v223
      %282 = vmatprep.subr.mxu0 0.0
      %283 = vmatpush1.msra.mxu0 %v222
      %284 = vmatprep.subr.mxu0 0.0
      %285 = vmatpush1.msra.mxu0 %v221
      %286 = vmatprep.subr.mxu0 0.0
      %287 = vmatpush1.msra.mxu0 %v220
      %288 = vmatprep.subr.mxu0 0.0
      %289 = vmatpush1.msra.mxu0 %v219
      %290 = vmatprep.subr.mxu0 0.0
      %291 = vmatpush1.msra.mxu0 %v218
      %292 = vmatprep.subr.mxu0 0.0
      %293 = vmatpush1.msra.mxu0 %v217
      %294 = vmatprep.subr.mxu0 0.0
      %295 = vmatpush1.msra.mxu0 %v216
      %296 = vmatprep.subr.mxu0 0.0
      %297 = vmatpush1.msra.mxu0 %v215
      %298 = vmatprep.subr.mxu0 0.0
      %299 = vmatpush1.msra.mxu0 %v214
      %300 = vmatprep.subr.mxu0 0.0
      %301 = vmatpush1.msra.mxu0 %v213
      %302 = vmatprep.subr.mxu0 0.0
      %303 = vmatpush1.msra.mxu0 %v212
      %304 = vmatprep.subr.mxu0 0.0
      %305 = vmatpush1.msra.mxu0 %v211
      %306 = vmatprep.subr.mxu0 0.0
      %307 = vmatpush1.msra.mxu0 %v210
      %308 = vmatprep.subr.mxu0 0.0
      %309 = vmatpush1.msra.mxu0 %v209
      %310 = vmatprep.subr.mxu0 0.0
      %311 = vmatpush1.msra.mxu0 %v208
      %312 = vmatprep.subr.mxu0 0.0
      %313 = vmatpush2.msra.mxu0 0.0
      %314 = vmatprep.subr.mxu0 0.0
      %315 = vmatpush2.msra.mxu0 0.0
      %316 = vmatprep.subr.mxu0 0.0
      %317 = vmatpush2.msra.mxu0 0.0
      %318 = vmatprep.subr.mxu0 0.0
      %319 = vmatpush2.msra.mxu0 0.0
      %320 = vmatprep.subr.mxu0 0.0
      %321 = vmatpush2.msra.mxu0 0.0
      %322 = vmatprep.subr.mxu0 0.0
      %323 = vmatpush2.msra.mxu0 0.0
      %324 = vmatprep.subr.mxu0 0.0
      %325 = vmatpush2.msra.mxu0 0.0
      %326 = vmatprep.subr.mxu0 0.0
      %327 = vmatpush2.msra.mxu0 0.0
      %328 = vmatprep.subr.mxu0 0.0
      %329 = vmatpush2.msra.mxu0 0.0
      %330 = vmatprep.subr.mxu0 0.0
      %331 = vmatpush2.msra.mxu0 0.0
      %332 = vmatprep.subr.mxu0 0.0
      %333 = vmatpush2.msra.mxu0 0.0
      %334 = vmatprep.subr.mxu0 0.0
      %335 = vmatpush2.msra.mxu0 0.0
      %336 = vmatprep.subr.mxu0 0.0
      %337 = vmatpush2.msra.mxu0 0.0
      %338 = vmatprep.subr.mxu0 0.0
      %339 = vmatpush2.msra.mxu0 %v278
      %340 = vmatprep.subr.mxu0 0.0
      %341 = vmatpush2.msra.mxu0 %v225
      %342 = vmatprep.subr.mxu0 0.0
      %343 = vmatpush2.msra.mxu0 %v224
      %344 = vmatprep.mubr.f32.mxu0 %v229
      %345 = vmatmul.mubr.f32.gmra.mxu0 %v176
      %v346 = vpop.f32.mrf.mxu0
      %v347 = vadd.f32 0.0, %v346
      %v348 = vpop.f32.mrf.mxu0
      %349 = vmatprep.mubr.f32.mxu0 %v232
      %350 = vmatmul.mubr.f32.gmra.mxu0 %v178
      %v351 = vpop.f32.mrf.mxu0
      %v352 = vadd.f32 0.0, %v351
      %v353 = vpop.f32.mrf.mxu0
      %354 = vmatprep.mubr.f32.mxu0 %v235
      %355 = vmatmul.mubr.f32.gmra.mxu0 %v180
      %v356 = vpop.f32.mrf.mxu0
      %v357 = vadd.f32 0.0, %v356
      %v358 = vpop.f32.mrf.mxu0
      %359 = vmatprep.mubr.f32.mxu0 %v238
      %360 = vmatmul.mubr.f32.gmra.mxu0 %v182
      %v361 = vpop.f32.mrf.mxu0
      %v362 = vadd.f32 0.0, %v361
      %v363 = vpop.f32.mrf.mxu0
      %364 = vmatprep.mubr.f32.mxu0 %v241
      %365 = vmatmul.mubr.f32.gmra.mxu0 %v184
      %v366 = vpop.f32.mrf.mxu0
      %v367 = vadd.f32 0.0, %v366
      %v368 = vpop.f32.mrf.mxu0
      %369 = vmatprep.mubr.f32.mxu0 %v244
      %370 = vmatmul.mubr.f32.gmra.mxu0 %v186
      %v371 = vpop.f32.mrf.mxu0
      %v372 = vadd.f32 0.0, %v371
      %v373 = vpop.f32.mrf.mxu0
      %374 = vmatprep.mubr.f32.mxu0 %v247
      %375 = vmatmul.mubr.f32.gmra.mxu0 %v188
      %v376 = vpop.f32.mrf.mxu0
      %v377 = vadd.f32 0.0, %v376
      %v378 = vpop.f32.mrf.mxu0
      %379 = vmatprep.mubr.f32.mxu0 %v250
      %380 = vmatmul.mubr.f32.gmra.mxu0 %v190
      %v381 = vpop.f32.mrf.mxu0
      %v382 = vadd.f32 0.0, %v381
      %v383 = vpop.f32.mrf.mxu0
      %384 = vmatprep.mubr.f32.mxu0 %v253
      %385 = vmatmul.mubr.f32.gmra.mxu0 %v192
      %v386 = vpop.f32.mrf.mxu0
      %v387 = vadd.f32 0.0, %v386
      %v388 = vpop.f32.mrf.mxu0
      %389 = vmatprep.mubr.f32.mxu0 %v256
      %390 = vmatmul.mubr.f32.gmra.mxu0 %v194
      %v391 = vpop.f32.mrf.mxu0
      %v392 = vadd.f32 0.0, %v391
      %v393 = vpop.f32.mrf.mxu0
      %394 = vmatprep.mubr.f32.mxu0 %v259
      %395 = vmatmul.mubr.f32.gmra.mxu0 %v196
      %v396 = vpop.f32.mrf.mxu0
      %v397 = vadd.f32 0.0, %v396
      %v398 = vpop.f32.mrf.mxu0
      %399 = vmatprep.mubr.f32.mxu0 %v262
      %400 = vmatmul.mubr.f32.gmra.mxu0 %v198
      %v401 = vpop.f32.mrf.mxu0
      %v402 = vadd.f32 0.0, %v401
      %v403 = vpop.f32.mrf.mxu0
      %404 = vmatprep.mubr.f32.mxu0 %v265
      %405 = vmatmul.mubr.f32.gmra.mxu0 %v200
      %v406 = vpop.f32.mrf.mxu0
      %v407 = vadd.f32 0.0, %v406
      %v408 = vpop.f32.mrf.mxu0
      %409 = vmatprep.mubr.f32.mxu0 %v268
      %410 = vmatmul.mubr.f32.gmra.mxu0 %v202
      %v411 = vpop.f32.mrf.mxu0
      %v412 = vadd.f32 0.0, %v411
      %v413 = vpop.f32.mrf.mxu0
      %414 = vmatprep.mubr.f32.mxu0 %v271
      %415 = vmatmul.mubr.f32.gmra.mxu0 %v204
      %v416 = vpop.f32.mrf.mxu0
      %v417 = vadd.f32 0.0, %v416
      %v418 = vpop.f32.mrf.mxu0
      %419 = vmatprep.mubr.f32.mxu0 %v274
      %420 = vmatmul.mubr.f32.gmra.mxu0 %v206
      %v421 = vpop.f32.mrf.mxu0
      %v422 = vadd.f32 0.0, %v421
      %v423 = vpop.f32.mrf.mxu0
      %424 = vdwg.mxu0
      %v425 = vmax.f32 %v347, %v367
      %v426 = vmax.f32 %v352, %v372
      %v427 = vmax.f32 %v357, %v377
      %v428 = vmax.f32 %v362, %v382
      %v429 = vmax.f32 %v387, %v407
      %v430 = vmax.f32 %v392, %v412
      %v431 = vmax.f32 %v397, %v417
      %v432 = vmax.f32 %v402, %v422
      %v433 = vmax.f32 %v425, %v429
      %v434 = vmax.f32 %v426, %v430
      %v435 = vmax.f32 %v427, %v431
      %v436 = vmax.f32 %v428, %v432
      %v437 = vld [vmem:[%s2] sm:$0x1]
      %v439 = vlaneseq
      %v440 = vshrl.u32 %v439, 7
      %v441 = vsub.s32 0, %v440
      %v442 = vrot.slane %v437, %v441
      %v444 = vadd.f32 %v433, %v442
      %v445 = vadd.f32 %v434, %v442
      %v446 = vadd.f32 %v435, %v442
      %v447 = vadd.f32 %v436, %v442
      %v448 = vmax.f32 %v444, 0.0
      %v449 = vmax.f32 %v445, 0.0
      %v450 = vmax.f32 %v446, 0.0
      %v451 = vmax.f32 %v447, 0.0
      %vm452 = vcmask 130048
      %453 = vst.msk [vmem:[%s175] sm:$0xff] %vm452, %v448
      %454 = vst.msk [vmem:[%s175 + $0x8] sm:$0xff] %vm452, %v449
      %455 = vst.msk [vmem:[%s175 + $0x10] sm:$0xff] %vm452, %v450
      %456 = vst.msk [vmem:[%s175 + $0x18] sm:$0xff] %vm452, %v451
      %p457 = scmp.lt.s32.totalorder %s14, 1
      %s458 = scalar_select %p457, %s14, 1
      %s459 = smul.addr %s458, 4
      %s460 = smul.addr %s459, 8
      %s461 = scalar_lea.vmem %s3, %s460
      // Predicated region
      $region33: #{net_forward.4} parent=31 // pred_check
        %p462 = pneg %p100
      $region34: #{net_forward.4} parent=31 // pred_check_branch
        %464 = sbr.rel (%p462) target = $region36
      $region35: #{net_forward.4} parent=31 // pred_region
        _
      $region36: #{net_forward.4} parent=31 // pred_fallthru
        _
    $region32: #{net_forward.4} parent=5 // pred_fallthru
      _
    %p465 = scmp.le.s32.totalorder 2, %s9
    // Predicated region
    $region37: #{net_forward.4} parent=5 // pred_check
      %p466 = pneg %p465
    $region38: #{net_forward.4} parent=5 // pred_check_branch
      %468 = sbr.rel (%p466) target = $region40
    $region39: #{net_forward.4} parent=5 // pred_region
      %s469 = ssub.s32 %s9, 2
      // Predicated region
      $region41: #{net_forward.4} parent=39 // pred_check
        %p470 = pneg %p106
      $region42: #{net_forward.4} parent=39 // pred_check_branch
        %472 = sbr.rel (%p470) target = $region44
      $region43: #{net_forward.4} parent=39 // pred_region
        %p473 = scmp.lt.s32.totalorder %s15, 1
        %s474 = scalar_select %p473, %s15, 1
        %s475 = smul.addr %s474, 4
        %s476 = smul.addr %s475, 8
        %s477 = scalar_lea.vmem %s3, %s476
      $region44: #{net_forward.4} parent=39 // pred_fallthru
        _
    $region40: #{net_forward.4} parent=5 // pred_fallthru
      _
  $region6: #{net_forward.4} parent=0 // loop_footer
    %s13 = sadd.s32 1, %s9
  $region7: #{net_forward.4} parent=0 // loop_footer_branch
    %8 = sbr.rel target = $region3
  $region8: #{net_forward.4} parent=0 // loop_exit
    _

// kernel: net_forward.5
$region0: #{net_forward.5}
  #allocation0 [shape = 'u32[]', space=smem, size = 0x4, offset = 0x4, fixed_abs, tag = 'smem constant byte address 0x4 - core index']
  #allocation1 [shape = 'u32[144,128]{1,0:T(1,128)}', space=vmem, size = 0x12000, scoped, tag = 'internal scratch']
  %s0 = inlined_call_operand.vmem [shape: f32[8,400], index: 0, kind: input, shape index: {}]
  %s1 = inlined_call_operand.vmem [shape: f32[400,120], index: 1, kind: input, shape index: {}]
  %s2 = inlined_call_operand.vmem [shape: f32[1,120], index: 2, kind: input, shape index: {}]
  %s3 = inlined_call_operand.vmem [shape: f32[120,84], index: 3, kind: input, shape index: {}]
  %s4 = inlined_call_operand.vmem [shape: f32[1,84], index: 4, kind: input, shape index: {}]
  %s5 = inlined_call_operand.vmem [shape: f32[84,128], index: 5, kind: input, shape index: {}]
  %s6 = inlined_call_operand.vmem [shape: f32[1,128], index: 6, kind: input, shape index: {}]
  %s7 = inlined_call_operand.vmem [shape: f32[8,128], index: 7, kind: output, shape index: {}]
  %s8 = sld [smem:[#allocation0]]
  $region38: #{net_forward.5} parent=0
    _
  %s10 = ssub.s32 1, %s8
  %s11 = scalar_select 0, %s10, %s8
  // Predicated region
  $region2: #{net_forward.5} parent=0 // pred_check
    _
  $region3: #{net_forward.5} parent=0 // pred_check_branch
    %13 = sbr.rel (0) target = $region5
  $region4: #{net_forward.5} parent=0 // pred_region
    _
  $region5: #{net_forward.5} parent=0 // pred_fallthru
    _
  // Predicated region
  $region6: #{net_forward.5} parent=0 // pred_check
    _
  $region7: #{net_forward.5} parent=0 // pred_check_branch
    %15 = sbr.rel (0) target = $region9
  $region8: #{net_forward.5} parent=0 // pred_region
    _
  $region9: #{net_forward.5} parent=0 // pred_fallthru
    _
  // Predicated region
  $region10: #{net_forward.5} parent=0 // pred_check
    _
  $region11: #{net_forward.5} parent=0 // pred_check_branch
    %17 = sbr.rel (0) target = $region13
  $region12: #{net_forward.5} parent=0 // pred_region
    _
  $region13: #{net_forward.5} parent=0 // pred_fallthru
    _
  // Predicated region
  $region14: #{net_forward.5} parent=0 // pred_check
    _
  $region15: #{net_forward.5} parent=0 // pred_check_branch
    %19 = sbr.rel (0) target = $region17
  $region16: #{net_forward.5} parent=0 // pred_region
    _
  $region17: #{net_forward.5} parent=0 // pred_fallthru
    _
  // Predicated region
  $region18: #{net_forward.5} parent=0 // pred_check
    _
  $region19: #{net_forward.5} parent=0 // pred_check_branch
    %21 = sbr.rel (0) target = $region21
  $region20: #{net_forward.5} parent=0 // pred_region
    _
  $region21: #{net_forward.5} parent=0 // pred_fallthru
    _
  // Predicated region
  $region22: #{net_forward.5} parent=0 // pred_check
    _
  $region23: #{net_forward.5} parent=0 // pred_check_branch
    %23 = sbr.rel (0) target = $region25
  $region24: #{net_forward.5} parent=0 // pred_region
    _
  $region25: #{net_forward.5} parent=0 // pred_fallthru
    _
  // Predicated region
  $region26: #{net_forward.5} parent=0 // pred_check
    _
  $region27: #{net_forward.5} parent=0 // pred_check_branch
    %25 = sbr.rel (0) target = $region29
  $region28: #{net_forward.5} parent=0 // pred_region
    _
  $region29: #{net_forward.5} parent=0 // pred_fallthru
    _
  %v26 = vld [vmem:[%s0] sm:$0xff]
  %v27 = vld [vmem:[%s0 + $0x8] sm:$0xff]
  %v28 = vld [vmem:[%s0 + $0x10] sm:$0xff]
  %v29 = vld [vmem:[%s0 + $0x18] sm:$0xff]
  %v30 = vld [vmem:[%s1] sm:$0xff]
  %v31 = vld [vmem:[%s1 + $0x8] sm:$0xff]
  %v32 = vld [vmem:[%s1 + $0x10] sm:$0xff]
  %v33 = vld [vmem:[%s1 + $0x18] sm:$0xff]
  %v34 = vld [vmem:[%s1 + $0x20] sm:$0xff]
  %v35 = vld [vmem:[%s1 + $0x28] sm:$0xff]
  %v36 = vld [vmem:[%s1 + $0x30] sm:$0xff]
  %v37 = vld [vmem:[%s1 + $0x38] sm:$0xff]
  %v38 = vld [vmem:[%s1 + $0x40] sm:$0xff]
  %v39 = vld [vmem:[%s1 + $0x48] sm:$0xff]
  %v40 = vld [vmem:[%s1 + $0x50] sm:$0xff]
  %v41 = vld [vmem:[%s1 + $0x58] sm:$0xff]
  %v42 = vld [vmem:[%s1 + $0x60] sm:$0xff]
  %v43 = vld [vmem:[%s1 + $0x68] sm:$0xff]
  %v44 = vld [vmem:[%s1 + $0x70] sm:$0xff]
  %v45 = vld [vmem:[%s1 + $0x78] sm:$0xff]
  %v46 = vld [vmem:[%s1 + $0x80] sm:$0xff]
  %v47 = vld [vmem:[%s1 + $0x88] sm:$0xff]
  %v48 = vld [vmem:[%s1 + $0x90] sm:$0xff]
  %v49 = vld [vmem:[%s1 + $0x98] sm:$0xff]
  %v50 = vld [vmem:[%s1 + $0xa0] sm:$0xff]
  %v51 = vld [vmem:[%s1 + $0xa8] sm:$0xff]
  %v52 = vld [vmem:[%s1 + $0xb0] sm:$0xff]
  %v53 = vld [vmem:[%s1 + $0xb8] sm:$0xff]
  %v54 = vld [vmem:[%s1 + $0xc0] sm:$0xff]
  %v55 = vld [vmem:[%s1 + $0xc8] sm:$0xff]
  %v56 = vld [vmem:[%s1 + $0xd0] sm:$0xff]
  %v57 = vld [vmem:[%s1 + $0xd8] sm:$0xff]
  %v58 = vld [vmem:[%s1 + $0xe0] sm:$0xff]
  %v59 = vld [vmem:[%s1 + $0xe8] sm:$0xff]
  %v60 = vld [vmem:[%s1 + $0xf0] sm:$0xff]
  %v61 = vld [vmem:[%s1 + $0xf8] sm:$0xff]
  %v62 = vld [vmem:[%s1 + $0x100] sm:$0xff]
  %v63 = vld [vmem:[%s1 + $0x108] sm:$0xff]
  %v64 = vld [vmem:[%s1 + $0x110] sm:$0xff]
  %v65 = vld [vmem:[%s1 + $0x118] sm:$0xff]
  %v66 = vld [vmem:[%s1 + $0x120] sm:$0xff]
  %v67 = vld [vmem:[%s1 + $0x128] sm:$0xff]
  %v68 = vld [vmem:[%s1 + $0x130] sm:$0xff]
  %v69 = vld [vmem:[%s1 + $0x138] sm:$0xff]
  %v70 = vld [vmem:[%s1 + $0x140] sm:$0xff]
  %v71 = vld [vmem:[%s1 + $0x148] sm:$0xff]
  %v72 = vld [vmem:[%s1 + $0x150] sm:$0xff]
  %v73 = vld [vmem:[%s1 + $0x158] sm:$0xff]
  %v74 = vld [vmem:[%s1 + $0x160] sm:$0xff]
  %v75 = vld [vmem:[%s1 + $0x168] sm:$0xff]
  %v76 = vld [vmem:[%s1 + $0x170] sm:$0xff]
  %v77 = vld [vmem:[%s1 + $0x178] sm:$0xff]
  %v78 = vld [vmem:[%s1 + $0x180] sm:$0xff]
  %v79 = vld [vmem:[%s1 + $0x188] sm:$0xff]
  %v80 = vld [vmem:[%s2] sm:$0x1]
  %v82 = vlaneseq
  %v83 = vshrl.u32 %v82, 7
  %v84 = vsub.s32 0, %v83
  %v85 = vrot.slane %v80, %v84
  %vm87 = vcmask 130048
  %v89 = vsel %vm87, %v29, 0
  %91 = vmatprep.subr.mxu0 0.0
  %92 = vmatpush1.msra.mxu0 %v45
  %93 = vmatprep.subr.mxu0 0.0
  %94 = vmatpush1.msra.mxu0 %v44
  %95 = vmatprep.subr.mxu0 0.0
  %96 = vmatpush1.msra.mxu0 %v43
  %97 = vmatprep.subr.mxu0 0.0
  %98 = vmatpush1.msra.mxu0 %v42
  %99 = vmatprep.subr.mxu0 0.0
  %100 = vmatpush1.msra.mxu0 %v41
  %101 = vmatprep.subr.mxu0 0.0
  %102 = vmatpush1.msra.mxu0 %v40
  %103 = vmatprep.subr.mxu0 0.0
  %104 = vmatpush1.msra.mxu0 %v39
  %105 = vmatprep.subr.mxu0 0.0
  %106 = vmatpush1.msra.mxu0 %v38
  %107 = vmatprep.subr.mxu0 0.0
  %108 = vmatpush1.msra.mxu0 %v37
  %109 = vmatprep.subr.mxu0 0.0
  %110 = vmatpush1.msra.mxu0 %v36
  %111 = vmatprep.subr.mxu0 0.0
  %112 = vmatpush1.msra.mxu0 %v35
  %113 = vmatprep.subr.mxu0 0.0
  %114 = vmatpush1.msra.mxu0 %v34
  %115 = vmatprep.subr.mxu0 0.0
  %116 = vmatpush1.msra.mxu0 %v33
  %117 = vmatprep.subr.mxu0 0.0
  %118 = vmatpush1.msra.mxu0 %v32
  %119 = vmatprep.subr.mxu0 0.0
  %120 = vmatpush1.msra.mxu0 %v31
  %121 = vmatprep.subr.mxu0 0.0
  %122 = vmatpush1.msra.mxu0 %v30
  %123 = vmatprep.subr.mxu0 0.0
  %124 = vmatpush2.msra.mxu0 %v61
  %125 = vmatprep.subr.mxu0 0.0
  %126 = vmatpush2.msra.mxu0 %v60
  %127 = vmatprep.subr.mxu0 0.0
  %128 = vmatpush2.msra.mxu0 %v59
  %129 = vmatprep.subr.mxu0 0.0
  %130 = vmatpush2.msra.mxu0 %v58
  %131 = vmatprep.subr.mxu0 0.0
  %132 = vmatpush2.msra.mxu0 %v57
  %133 = vmatprep.subr.mxu0 0.0
  %134 = vmatpush2.msra.mxu0 %v56
  %135 = vmatprep.subr.mxu0 0.0
  %136 = vmatpush2.msra.mxu0 %v55
  %137 = vmatprep.subr.mxu0 0.0
  %138 = vmatpush2.msra.mxu0 %v54
  %139 = vmatprep.subr.mxu0 0.0
  %140 = vmatpush2.msra.mxu0 %v53
  %141 = vmatprep.subr.mxu0 0.0
  %142 = vmatpush2.msra.mxu0 %v52
  %143 = vmatprep.subr.mxu0 0.0
  %144 = vmatpush2.msra.mxu0 %v51
  %145 = vmatprep.subr.mxu0 0.0
  %146 = vmatpush2.msra.mxu0 %v50
  %147 = vmatprep.subr.mxu0 0.0
  %148 = vmatpush2.msra.mxu0 %v49
  %149 = vmatprep.subr.mxu0 0.0
  %150 = vmatpush2.msra.mxu0 %v48
  %151 = vmatprep.subr.mxu0 0.0
  %152 = vmatpush2.msra.mxu0 %v47
  %153 = vmatprep.subr.mxu0 0.0
  %154 = vmatpush2.msra.mxu0 %v46
  %155 = vmatprep.mubr.f32.mxu0 %v27
  %156 = vmatmul.mubr.f32.gmra.mxu0 %v26
  %v157 = vpop.f32.mrf.mxu0
  %v158 = vadd.f32 %v85, %v157
  %v159 = vpop.f32.mrf.mxu0
  %160 = vdwg.mxu0
  %161 = vmatprep.subr.mxu0 0.0
  %162 = vmatpush1.msra.mxu0 %v77
  %163 = vmatprep.subr.mxu0 0.0
  %164 = vmatpush1.msra.mxu0 %v76
  %165 = vmatprep.subr.mxu0 0.0
  %166 = vmatpush1.msra.mxu0 %v75
  %167 = vmatprep.subr.mxu0 0.0
  %168 = vmatpush1.msra.mxu0 %v74
  %169 = vmatprep.subr.mxu0 0.0
  %170 = vmatpush1.msra.mxu0 %v73
  %171 = vmatprep.subr.mxu0 0.0
  %172 = vmatpush1.msra.mxu0 %v72
  %173 = vmatprep.subr.mxu0 0.0
  %174 = vmatpush1.msra.mxu0 %v71
  %175 = vmatprep.subr.mxu0 0.0
  %176 = vmatpush1.msra.mxu0 %v70
  %177 = vmatprep.subr.mxu0 0.0
  %178 = vmatpush1.msra.mxu0 %v69
  %179 = vmatprep.subr.mxu0 0.0
  %180 = vmatpush1.msra.mxu0 %v68
  %181 = vmatprep.subr.mxu0 0.0
  %182 = vmatpush1.msra.mxu0 %v67
  %183 = vmatprep.subr.mxu0 0.0
  %184 = vmatpush1.msra.mxu0 %v66
  %185 = vmatprep.subr.mxu0 0.0
  %186 = vmatpush1.msra.mxu0 %v65
  %187 = vmatprep.subr.mxu0 0.0
  %188 = vmatpush1.msra.mxu0 %v64
  %189 = vmatprep.subr.mxu0 0.0
  %190 = vmatpush1.msra.mxu0 %v63
  %191 = vmatprep.subr.mxu0 0.0
  %192 = vmatpush1.msra.mxu0 %v62
  %193 = vmatprep.subr.mxu0 0.0
  %194 = vmatpush2.msra.mxu0 0.0
  %195 = vmatprep.subr.mxu0 0.0
  %196 = vmatpush2.msra.mxu0 0.0
  %197 = vmatprep.subr.mxu0 0.0
  %198 = vmatpush2.msra.mxu0 0.0
  %199 = vmatprep.subr.mxu0 0.0
  %200 = vmatpush2.msra.mxu0 0.0
  %201 = vmatprep.subr.mxu0 0.0
  %202 = vmatpush2.msra.mxu0 0.0
  %203 = vmatprep.subr.mxu0 0.0
  %204 = vmatpush2.msra.mxu0 0.0
  %205 = vmatprep.subr.mxu0 0.0
  %206 = vmatpush2.msra.mxu0 0.0
  %207 = vmatprep.subr.mxu0 0.0
  %208 = vmatpush2.msra.mxu0 0.0
  %209 = vmatprep.subr.mxu0 0.0
  %210 = vmatpush2.msra.mxu0 0.0
  %211 = vmatprep.subr.mxu0 0.0
  %212 = vmatpush2.msra.mxu0 0.0
  %213 = vmatprep.subr.mxu0 0.0
  %214 = vmatpush2.msra.mxu0 0.0
  %215 = vmatprep.subr.mxu0 0.0
  %216 = vmatpush2.msra.mxu0 0.0
  %217 = vmatprep.subr.mxu0 0.0
  %218 = vmatpush2.msra.mxu0 0.0
  %219 = vmatprep.subr.mxu0 0.0
  %220 = vmatpush2.msra.mxu0 0.0
  %221 = vmatprep.subr.mxu0 0.0
  %222 = vmatpush2.msra.mxu0 %v79
  %223 = vmatprep.subr.mxu0 0.0
  %224 = vmatpush2.msra.mxu0 %v78
  %225 = vmatprep.mubr.f32.mxu0 %v89
  %226 = vmatmul.mubr.f32.gmra.mxu0 %v28
  %v227 = vpop.f32.mrf.mxu0
  %v228 = vadd.f32 %v158, %v227
  %v229 = vpop.f32.mrf.mxu0
  %230 = vdwg.mxu0
  %v231 = vmax.f32 %v228, 0.0
  %v232 = vld [vmem:[%s3] sm:$0xff]
  %v233 = vld [vmem:[%s3 + $0x8] sm:$0xff]
  %v234 = vld [vmem:[%s3 + $0x10] sm:$0xff]
  %v235 = vld [vmem:[%s3 + $0x18] sm:$0xff]
  %v236 = vld [vmem:[%s3 + $0x20] sm:$0xff]
  %v237 = vld [vmem:[%s3 + $0x28] sm:$0xff]
  %v238 = vld [vmem:[%s3 + $0x30] sm:$0xff]
  %v239 = vld [vmem:[%s3 + $0x38] sm:$0xff]
  %v240 = vld [vmem:[%s3 + $0x40] sm:$0xff]
  %v241 = vld [vmem:[%s3 + $0x48] sm:$0xff]
  %v242 = vld [vmem:[%s3 + $0x50] sm:$0xff]
  %v243 = vld [vmem:[%s3 + $0x58] sm:$0xff]
  %v244 = vld [vmem:[%s3 + $0x60] sm:$0xff]
  %v245 = vld [vmem:[%s3 + $0x68] sm:$0xff]
  %v246 = vld [vmem:[%s3 + $0x70] sm:$0xff]
  %v247 = vld [vmem:[%s4] sm:$0x1]
  %v249 = vlaneseq
  %v250 = vshrl.u32 %v249, 7
  %v251 = vsub.s32 0, %v250
  %v252 = vrot.slane %v247, %v251
  %vm254 = vcmask 982016
  %v256 = vsel %vm254, %v231, 0
  %258 = vmatprep.subr.mxu0 0.0
  %259 = vmatpush1.msra.mxu0 0.0
  %260 = vmatprep.subr.mxu0 0.0
  %261 = vmatpush1.msra.mxu0 %v246
  %262 = vmatprep.subr.mxu0 0.0
  %263 = vmatpush1.msra.mxu0 %v245
  %264 = vmatprep.subr.mxu0 0.0
  %265 = vmatpush1.msra.mxu0 %v244
  %266 = vmatprep.subr.mxu0 0.0
  %267 = vmatpush1.msra.mxu0 %v243
  %268 = vmatprep.subr.mxu0 0.0
  %269 = vmatpush1.msra.mxu0 %v242
  %270 = vmatprep.subr.mxu0 0.0
  %271 = vmatpush1.msra.mxu0 %v241
  %272 = vmatprep.subr.mxu0 0.0
  %273 = vmatpush1.msra.mxu0 %v240
  %274 = vmatprep.subr.mxu0 0.0
  %275 = vmatpush1.msra.mxu0 %v239
  %276 = vmatprep.subr.mxu0 0.0
  %277 = vmatpush1.msra.mxu0 %v238
  %278 = vmatprep.subr.mxu0 0.0
  %279 = vmatpush1.msra.mxu0 %v237
  %280 = vmatprep.subr.mxu0 0.0
  %281 = vmatpush1.msra.mxu0 %v236
  %282 = vmatprep.subr.mxu0 0.0
  %283 = vmatpush1.msra.mxu0 %v235
  %284 = vmatprep.subr.mxu0 0.0
  %285 = vmatpush1.msra.mxu0 %v234
  %286 = vmatprep.subr.mxu0 0.0
  %287 = vmatpush1.msra.mxu0 %v233
  %288 = vmatprep.subr.mxu0 0.0
  %289 = vmatpush1.msra.mxu0 %v232
  %290 = vmatprep.subr.mxu0 0.0
  %291 = vmatpush2.msra.mxu0 0.0
  %292 = vmatprep.subr.mxu0 0.0
  %293 = vmatpush2.msra.mxu0 0.0
  %294 = vmatprep.subr.mxu0 0.0
  %295 = vmatpush2.msra.mxu0 0.0
  %296 = vmatprep.subr.mxu0 0.0
  %297 = vmatpush2.msra.mxu0 0.0
  %298 = vmatprep.subr.mxu0 0.0
  %299 = vmatpush2.msra.mxu0 0.0
  %300 = vmatprep.subr.mxu0 0.0
  %301 = vmatpush2.msra.mxu0 0.0
  %302 = vmatprep.subr.mxu0 0.0
  %303 = vmatpush2.msra.mxu0 0.0
  %304 = vmatprep.subr.mxu0 0.0
  %305 = vmatpush2.msra.mxu0 0.0
  %306 = vmatprep.subr.mxu0 0.0
  %307 = vmatpush2.msra.mxu0 0.0
  %308 = vmatprep.subr.mxu0 0.0
  %309 = vmatpush2.msra.mxu0 0.0
  %310 = vmatprep.subr.mxu0 0.0
  %311 = vmatpush2.msra.mxu0 0.0
  %312 = vmatprep.subr.mxu0 0.0
  %313 = vmatpush2.msra.mxu0 0.0
  %314 = vmatprep.subr.mxu0 0.0
  %315 = vmatpush2.msra.mxu0 0.0
  %316 = vmatprep.subr.mxu0 0.0
  %317 = vmatpush2.msra.mxu0 0.0
  %318 = vmatprep.subr.mxu0 0.0
  %319 = vmatpush2.msra.mxu0 0.0
  %320 = vmatprep.subr.mxu0 0.0
  %321 = vmatpush2.msra.mxu0 0.0
  %322 = vmatprep.mubr.f32.mxu0 0.0
  %323 = vmatmul.mubr.f32.gmra.mxu0 %v256
  %v324 = vpop.f32.mrf.mxu0
  %v325 = vadd.f32 %v252, %v324
  %v326 = vpop.f32.mrf.mxu0
  %327 = vdwg.mxu0
  %v328 = vmax.f32 %v325, 0.0
  %v329 = vld [vmem:[%s5] sm:$0xff]
  %v330 = vld [vmem:[%s5 + $0x8] sm:$0xff]
  %v331 = vld [vmem:[%s5 + $0x10] sm:$0xff]
  %v332 = vld [vmem:[%s5 + $0x18] sm:$0xff]
  %v333 = vld [vmem:[%s5 + $0x20] sm:$0xff]
  %v334 = vld [vmem:[%s5 + $0x28] sm:$0xff]
  %v335 = vld [vmem:[%s5 + $0x30] sm:$0xff]
  %v336 = vld [vmem:[%s5 + $0x38] sm:$0xff]
  %v337 = vld [vmem:[%s5 + $0x40] sm:$0xff]
  %v338 = vld [vmem:[%s5 + $0x48] sm:$0xff]
  %v339 = vld [vmem:[%s5 + $0x50] sm:$0xf]
  %v340 = vld [vmem:[%s6] sm:$0x1]
  %v342 = vlaneseq
  %v343 = vshrl.u32 %v342, 7
  %v344 = vsub.s32 0, %v343
  %v345 = vrot.slane %v340, %v344
  %vm347 = vcmask 687104
  %v349 = vsel %vm347, %v328, 0
  %vm351 = vcmask 1043456
  %v353 = vsel %vm351, %v339, 0
  %355 = vmatprep.subr.mxu0 0.0
  %356 = vmatpush1.msra.mxu0 0.0
  %357 = vmatprep.subr.mxu0 0.0
  %358 = vmatpush1.msra.mxu0 0.0
  %359 = vmatprep.subr.mxu0 0.0
  %360 = vmatpush1.msra.mxu0 0.0
  %361 = vmatprep.subr.mxu0 0.0
  %362 = vmatpush1.msra.mxu0 0.0
  %363 = vmatprep.subr.mxu0 0.0
  %364 = vmatpush1.msra.mxu0 0.0
  %365 = vmatprep.subr.mxu0 0.0
  %366 = vmatpush1.msra.mxu0 %v353
  %367 = vmatprep.subr.mxu0 0.0
  %368 = vmatpush1.msra.mxu0 %v338
  %369 = vmatprep.subr.mxu0 0.0
  %370 = vmatpush1.msra.mxu0 %v337
  %371 = vmatprep.subr.mxu0 0.0
  %372 = vmatpush1.msra.mxu0 %v336
  %373 = vmatprep.subr.mxu0 0.0
  %374 = vmatpush1.msra.mxu0 %v335
  %375 = vmatprep.subr.mxu0 0.0
  %376 = vmatpush1.msra.mxu0 %v334
  %377 = vmatprep.subr.mxu0 0.0
  %378 = vmatpush1.msra.mxu0 %v333
  %379 = vmatprep.subr.mxu0 0.0
  %380 = vmatpush1.msra.mxu0 %v332
  %381 = vmatprep.subr.mxu0 0.0
  %382 = vmatpush1.msra.mxu0 %v331
  %383 = vmatprep.subr.mxu0 0.0
  %384 = vmatpush1.msra.mxu0 %v330
  %385 = vmatprep.subr.mxu0 0.0
  %386 = vmatpush1.msra.mxu0 %v329
  %387 = vmatprep.subr.mxu0 0.0
  %388 = vmatpush2.msra.mxu0 0.0
  %389 = vmatprep.subr.mxu0 0.0
  %390 = vmatpush2.msra.mxu0 0.0
  %391 = vmatprep.subr.mxu0 0.0
  %392 = vmatpush2.msra.mxu0 0.0
  %393 = vmatprep.subr.mxu0 0.0
  %394 = vmatpush2.msra.mxu0 0.0
  %395 = vmatprep.subr.mxu0 0.0
  %396 = vmatpush2.msra.mxu0 0.0
  %397 = vmatprep.subr.mxu0 0.0
  %398 = vmatpush2.msra.mxu0 0.0
  %399 = vmatprep.subr.mxu0 0.0
  %400 = vmatpush2.msra.mxu0 0.0
  %401 = vmatprep.subr.mxu0 0.0
  %402 = vmatpush2.msra.mxu0 0.0
  %403 = vmatprep.subr.mxu0 0.0
  %404 = vmatpush2.msra.mxu0 0.0
  %405 = vmatprep.subr.mxu0 0.0
  %406 = vmatpush2.msra.mxu0 0.0
  %407 = vmatprep.subr.mxu0 0.0
  %408 = vmatpush2.msra.mxu0 0.0
  %409 = vmatprep.subr.mxu0 0.0
  %410 = vmatpush2.msra.mxu0 0.0
  %411 = vmatprep.subr.mxu0 0.0
  %412 = vmatpush2.msra.mxu0 0.0
  %413 = vmatprep.subr.mxu0 0.0
  %414 = vmatpush2.msra.mxu0 0.0
  %415 = vmatprep.subr.mxu0 0.0
  %416 = vmatpush2.msra.mxu0 0.0
  %417 = vmatprep.subr.mxu0 0.0
  %418 = vmatpush2.msra.mxu0 0.0
  %419 = vmatprep.mubr.f32.mxu0 0.0
  %420 = vmatmul.mubr.f32.gmra.mxu0 %v349
  %v421 = vpop.f32.mrf.mxu0
  %v422 = vadd.f32 %v345, %v421
  %v423 = vpop.f32.mrf.mxu0
  %424 = vdwg.mxu0
  %425 = vst [vmem:[%s7] sm:$0xff] %v422
  // Predicated region
  $region30: #{net_forward.5} parent=0 // pred_check
    _
  $region31: #{net_forward.5} parent=0 // pred_check_branch
    %427 = sbr.rel (0) target = $region33
  $region32: #{net_forward.5} parent=0 // pred_region
    _
  $region33: #{net_forward.5} parent=0 // pred_fallthru
    _
  // Predicated region
  $region34: #{net_forward.5} parent=0 // pred_check
    _
  $region35: #{net_forward.5} parent=0 // pred_check_branch
    %429 = sbr.rel (0) target = $region37
  $region36: #{net_forward.5} parent=0 // pred_region
    _
  $region37: #{net_forward.5} parent=0 // pred_fallthru
    _

</llo_original>
